<compile_context>
chip_gen: v6e
topology: v6e:2x2x1
jax: 0.10.0
libtpu: 0.0.40
codegen_flags: <defaults>
</compile_context>

<pallas_src>
import functools
import math

import jax
import jax.numpy as jnp
from jax import lax
from jax.experimental import pallas as pl
from jax.experimental.pallas import tpu as pltpu


def _round_up(x, m):
    return (x + m - 1) // m * m


def _cdiv(a, b):
    return -(-a // b)


def _cspn_kernel(split, Cin, Wp, L_OUT, x_ref, wt_ref, scale_ref, shift_ref, o_ref):
    """One (image, row-tile) grid step.

    x_ref:     (1, 1, Cin, L_IN) bf16  flattened padded row tile (row stride = Wp)
    wt_ref:    (KK, 9*Cin)       bf16  conv weight, taps (dy,dx,cin); row `split` is 0
    scale_ref: (KK, 1)           f32   folded BN scale (0 at row `split`)
    shift_ref: (KK, 1)           f32   folded BN shift (0 at row `split`)
    o_ref:     (1, KK, L_OUT)          output affinity (mid inserted at row `split`)
    """
    xf = x_ref[0, 0]                    # (Cin, L_IN) bf16
    wt = wt_ref[...]                    # (KK, 9*Cin) bf16
    KK = wt.shape[0]

    # 3x3 conv = 9 accumulated per-tap MXU matmuls.  Tap (dy, dx) of the flattened
    # padded tile is a lane shift of dy*Wp + dx; the shifted slices feed the MXU
    # directly (no im2col slab, no sublane concat).  f32 accumulation.
    conv = None
    for dy in range(3):
        for dx in range(3):
            t = dy * 3 + dx
            off = dy * Wp + dx
            tap = jnp.dot(wt[:, t * Cin:(t + 1) * Cin],
                          xf[:, off:off + L_OUT],
                          preferred_element_type=jnp.float32)    # (KK, L_OUT) f32
            conv = tap if conv is None else conv + tap

    # BatchNorm (eval mode) folded into per-channel scale/shift; row `split` stays 0.
    guide = conv * scale_ref[...] + shift_ref[...]               # (KK, L_OUT) f32

    # Affinity normalization: the zero row contributes nothing to either reduction.
    # One approx reciprocal (EUP) + one Newton step, shared by both terms.
    # NOTE: like the PyTorch reference, an all-zero guide pixel yields non-finite
    # affinities (no extra guard, to keep semantics identical).
    gsum = jnp.sum(jnp.abs(guide), axis=0, keepdims=True)        # (1, L_OUT)
    ssum = jnp.sum(guide, axis=0, keepdims=True)                 # (1, L_OUT)
    inv = pl.reciprocal(gsum, approx=True)
    inv = inv * (2.0 - gsum * inv)                               # Newton refinement
    gn = guide * inv                                             # guide / guide_sum
    mid = 1.0 - ssum * inv                                       # 1 - sum(guide/gsum)

    # Insert mid at row `split` via a row-select (no sublane concat), single store.
    row = lax.broadcasted_iota(jnp.int32, (KK, 1), 0)
    out = jnp.where(row == split, mid, gn)                       # (KK, L_OUT)
    o_ref[0] = out.astype(o_ref.dtype)


def cspn_generate_accelerate(feature, conv_w, bn_gamma, bn_beta, bn_mean, bn_var,
                             *, kernel_size=3, eps=1e-5, target_lanes=32768,
                             out_dtype=jnp.float32):
    """feature: (N, Cin, H, W) float32 (NCHW). Returns (N, K*K, H, W) `out_dtype`.

    Activations / conv weights are streamed into the kernel as bfloat16 (intentional —
    the op is memory bound); accumulation, BN and normalization are float32.  Pass
    out_dtype=jnp.bfloat16 to also halve the dominant output-write traffic if the
    downstream CSPN propagation step tolerates it (semantics change vs. the f32 module).
    """
    N, Cin, H, W = feature.shape
    assert kernel_size == 3, "CSPNGenerateAccelerate.generate is a fixed 3x3 conv"
    Cout = kernel_size * kernel_size - 1
    KK = kernel_size * kernel_size
    assert conv_w.shape == (Cout, Cin, 3, 3)
    Wp = W + 2

    # ---- tile geometry: TH output rows per tile, R_img tiles per image ----
    def _footprint(th):
        l_out = _round_up(th * Wp, 128)
        l_in = _cdiv(l_out + 2 * Wp + 2, Wp) * Wp
        return (2 * Cin * l_in * 2            # double-buffered bf16 input tile
                + 2 * KK * l_out * 4          # double-buffered output tile
                + 6 * KK * l_out * 4          # conv / guide / gn / out temporaries
                + 2 * Cin * l_out * 2)        # live tap slices

    TH = max(1, min(H, target_lanes // Wp))
    while TH > 1 and _footprint(TH) > 40 * 1024 * 1024:   # keep v7x (64 MiB VMEM) safe
        TH = max(1, TH // 2)
    R_img = _cdiv(H, TH)
    L_OUT = _round_up(TH * Wp, 128)                       # lane-dense output tile
    TROWS = _cdiv(L_OUT + 2 * Wp + 2, Wp)                 # input rows incl. halo/shift room
    L_IN = TROWS * Wp
    rows_needed = (R_img - 1) * TH + TROWS

    # ---- input prep: bf16, zero pad, overlapping row tiles (N, R_img, Cin, L_IN) ----
    x = feature.astype(jnp.bfloat16)
    xp = jnp.pad(x, ((0, 0), (0, 0), (1, rows_needed - H - 1), (1, 1)))
    tiles = jnp.stack([xp[:, :, r * TH: r * TH + TROWS, :] for r in range(R_img)], axis=1)
    a = tiles.reshape(N, R_img, Cin, L_IN)

    # ---- conv weight flattened to (dy, dx, cin) taps; zero row inserted at `split` ----
    split = math.ceil(Cout / 2)                # torch.chunk(guide, 2, dim=1) split point
    wt = jnp.transpose(conv_w, (0, 2, 3, 1)).reshape(Cout, 9 * Cin)
    wt = jnp.concatenate([wt[:split], jnp.zeros((1, 9 * Cin), wt.dtype), wt[split:]], 0)
    wt = wt.astype(jnp.bfloat16)

    # ---- BN (eval mode) folded into per-channel scale/shift, zero at row `split` ----
    inv_std = 1.0 / jnp.sqrt(bn_var.astype(jnp.float32) + eps)
    s = bn_gamma.astype(jnp.float32) * inv_std
    b = bn_beta.astype(jnp.float32) - bn_mean.astype(jnp.float32) * s
    zero1 = jnp.zeros((1,), jnp.float32)
    scale = jnp.concatenate([s[:split], zero1, s[split:]]).reshape(KK, 1)
    shift = jnp.concatenate([b[:split], zero1, b[split:]]).reshape(KK, 1)

    vmem_bytes = int(min(max(_footprint(TH) + (4 << 20), 16 << 20), 48 << 20))

    out_flat = pl.pallas_call(
        functools.partial(_cspn_kernel, split, Cin, Wp, L_OUT),
        out_shape=jax.ShapeDtypeStruct((N, KK, R_img * L_OUT), out_dtype),
        grid_spec=pltpu.PrefetchScalarGridSpec(
            num_scalar_prefetch=0,
            grid=(N, R_img),
            in_specs=[
                pl.BlockSpec((1, 1, Cin, L_IN), lambda n, r: (n, r, 0, 0)),
                pl.BlockSpec((KK, 9 * Cin), lambda n, r: (0, 0)),
                pl.BlockSpec((KK, 1), lambda n, r: (0, 0)),
                pl.BlockSpec((KK, 1), lambda n, r: (0, 0)),
            ],
            out_specs=pl.BlockSpec((1, KK, L_OUT), lambda n, r: (n, 0, r)),
        ),
        compiler_params=pltpu.CompilerParams(
            dimension_semantics=("parallel", "parallel"),   # independent tiles (megacore)
            vmem_limit_bytes=vmem_bytes,
        ),
    )(a, wt, scale, shift)

    # ---- final layout: reshape + crop only (no transposes over the big output) ----
    out = out_flat.reshape(N, KK, R_img, L_OUT)[:, :, :, :TH * Wp]
    out = out.reshape(N, KK, R_img * TH, Wp)[:, :, :H, :W]
    return out


def _reference(feature, conv_w, bn_gamma, bn_beta, bn_mean, bn_var, eps=1e-5):
    """Pure-JAX reference mirroring the PyTorch forward (BN in eval mode)."""
    y = lax.conv_general_dilated(
        feature, conv_w, window_strides=(1, 1), padding=((1, 1), (1, 1)),
        dimension_numbers=("NCHW", "OIHW", "NCHW"),
        precision=lax.Precision.HIGHEST)
    scale = bn_gamma / jnp.sqrt(bn_var + eps)
    shift = bn_beta - bn_mean * scale
    guide = y * scale[None, :, None, None] + shift[None, :, None, None]
    gsum = jnp.sum(jnp.abs(guide), axis=1, keepdims=True)
    guide = guide / gsum
    mid = 1.0 - jnp.sum(guide, axis=1, keepdims=True)
    c = guide.shape[1]
    split = math.ceil(c / 2)
    return jnp.concatenate([guide[:, :split], mid, guide[:, split:]], axis=1)


if __name__ == "__main__":
    # Small deterministic setup: in_channels=4, kernel_size=3 -> Cout = 8, output C = 9.
    N, Cin, H, W = 2, 4, 16, 16
    kernel_size = 3
    Cout = kernel_size * kernel_size - 1

    key = jax.random.PRNGKey(0)
    k_x, k_w, k_g, k_b, k_m, k_v = jax.random.split(key, 6)

    feature = jax.random.normal(k_x, (N, Cin, H, W), dtype=jnp.float32)
    conv_w = 0.1 * jax.random.normal(k_w, (Cout, Cin, 3, 3), dtype=jnp.float32)
    bn_gamma = jax.random.uniform(k_g, (Cout,), minval=0.5, maxval=1.5, dtype=jnp.float32)
    bn_beta = 0.1 * jax.random.normal(k_b, (Cout,), dtype=jnp.float32)
    bn_mean = 0.1 * jax.random.normal(k_m, (Cout,), dtype=jnp.float32)
    bn_var = jax.random.uniform(k_v, (Cout,), minval=0.5, maxval=1.5, dtype=jnp.float32)

    # The kernel streams activations/weights as bf16 (intentional quantization of the
    # memory-bound operands).  Pre-quantize them to bf16-representable f32 values so the
    # comparison against the f32 reference isolates kernel logic from that quantization.
    feature = feature.astype(jnp.bfloat16).astype(jnp.float32)
    conv_w = conv_w.astype(jnp.bfloat16).astype(jnp.float32)

    out = cspn_generate_accelerate(feature, conv_w, bn_gamma, bn_beta, bn_mean, bn_var,
                                   kernel_size=kernel_size)
    out = jax.block_until_ready(out)

    ref = _reference(feature, conv_w, bn_gamma, bn_beta, bn_mean, bn_var)

    assert out.shape == (N, kernel_size * kernel_size, H, W), out.shape
    assert bool(jnp.all(jnp.isfinite(out)))
    err = float(jnp.max(jnp.abs(out - ref)))
    assert bool(jnp.allclose(out, ref, rtol=1e-3, atol=1e-3)), f"max abs err = {err}"

    print("KERNEL_OK")
</pallas_src>

<mosaic_0001>
module attributes {stable_mosaic.version = 11 : i64} {
  func.func @_cspn_kernel(%arg0: i32, %arg1: i32, %arg2: memref<1x1x4x432xbf16, #tpu.memory_space<vmem>>, %arg3: memref<9x36xbf16, #tpu.memory_space<vmem>>, %arg4: memref<9x1xf32, #tpu.memory_space<vmem>>, %arg5: memref<9x1xf32, #tpu.memory_space<vmem>>, %arg6: memref<1x9x384xf32, #tpu.memory_space<vmem>>) attributes {dimension_semantics = [#tpu.dimension_semantics<parallel>, #tpu.dimension_semantics<parallel>], iteration_bounds = array<i64: 2, 1>, scalar_prefetch = 0 : i64, scratch_operands = 0 : i64, tpu.core_type = #tpu.core_type<tc>, window_params = [{transform_indices = @transform_0, window_bounds = array<i64: 1, 1, 4, 432>}, {pipeline_mode = #tpu.pipeline_mode<synchronous>, transform_indices = @transform_1, window_bounds = array<i64: 9, 36>}, {pipeline_mode = #tpu.pipeline_mode<synchronous>, transform_indices = @transform_2, window_bounds = array<i64: 9, 1>}, {pipeline_mode = #tpu.pipeline_mode<synchronous>, transform_indices = @transform_3, window_bounds = array<i64: 9, 1>}, {transform_indices = @transform_4, window_bounds = array<i64: 1, 9, 384>}]} {
    %c0 = arith.constant 0 : index
    %c0_0 = arith.constant 0 : index
    %c0_1 = arith.constant 0 : index
    %c0_2 = arith.constant 0 : index
    %0 = vector.load %arg2[%c0, %c0_0, %c0_1, %c0_2] : memref<1x1x4x432xbf16, #tpu.memory_space<vmem>>, vector<1x1x4x432xbf16>
    %1 = vector.shape_cast %0 : vector<1x1x4x432xbf16> to vector<4x432xbf16>
    %c0_3 = arith.constant 0 : index
    %c0_4 = arith.constant 0 : index
    %2 = vector.load %arg3[%c0_3, %c0_4] : memref<9x36xbf16, #tpu.memory_space<vmem>>, vector<9x36xbf16>
    %3 = vector.extract_strided_slice %2 {offsets = [0, 0], sizes = [9, 4], strides = [1, 1]} : vector<9x36xbf16> to vector<9x4xbf16>
    %4 = vector.extract_strided_slice %1 {offsets = [0, 0], sizes = [4, 384], strides = [1, 1]} : vector<4x432xbf16> to vector<4x384xbf16>
    %cst = arith.constant dense<0.000000e+00> : vector<9x384xf32>
    %5 = tpu.matmul %3, %4, %cst {dimension_numbers = #tpu.dot_dimension_numbers<[1], [0], [0], [1], [0, 0, 1, 1], [], []>} : vector<9x4xbf16>, vector<4x384xbf16>, vector<9x384xf32> -> vector<9x384xf32>
    %6 = vector.extract_strided_slice %2 {offsets = [0, 4], sizes = [9, 4], strides = [1, 1]} : vector<9x36xbf16> to vector<9x4xbf16>
    %7 = vector.extract_strided_slice %1 {offsets = [0, 1], sizes = [4, 384], strides = [1, 1]} : vector<4x432xbf16> to vector<4x384xbf16>
    %cst_5 = arith.constant dense<0.000000e+00> : vector<9x384xf32>
    %8 = tpu.matmul %6, %7, %cst_5 {dimension_numbers = #tpu.dot_dimension_numbers<[1], [0], [0], [1], [0, 0, 1, 1], [], []>} : vector<9x4xbf16>, vector<4x384xbf16>, vector<9x384xf32> -> vector<9x384xf32>
    %9 = arith.addf %5, %8 : vector<9x384xf32>
    %10 = vector.extract_strided_slice %2 {offsets = [0, 8], sizes = [9, 4], strides = [1, 1]} : vector<9x36xbf16> to vector<9x4xbf16>
    %11 = vector.extract_strided_slice %1 {offsets = [0, 2], sizes = [4, 384], strides = [1, 1]} : vector<4x432xbf16> to vector<4x384xbf16>
    %cst_6 = arith.constant dense<0.000000e+00> : vector<9x384xf32>
    %12 = tpu.matmul %10, %11, %cst_6 {dimension_numbers = #tpu.dot_dimension_numbers<[1], [0], [0], [1], [0, 0, 1, 1], [], []>} : vector<9x4xbf16>, vector<4x384xbf16>, vector<9x384xf32> -> vector<9x384xf32>
    %13 = arith.addf %9, %12 : vector<9x384xf32>
    %14 = vector.extract_strided_slice %2 {offsets = [0, 12], sizes = [9, 4], strides = [1, 1]} : vector<9x36xbf16> to vector<9x4xbf16>
    %15 = vector.extract_strided_slice %1 {offsets = [0, 18], sizes = [4, 384], strides = [1, 1]} : vector<4x432xbf16> to vector<4x384xbf16>
    %cst_7 = arith.constant dense<0.000000e+00> : vector<9x384xf32>
    %16 = tpu.matmul %14, %15, %cst_7 {dimension_numbers = #tpu.dot_dimension_numbers<[1], [0], [0], [1], [0, 0, 1, 1], [], []>} : vector<9x4xbf16>, vector<4x384xbf16>, vector<9x384xf32> -> vector<9x384xf32>
    %17 = arith.addf %13, %16 : vector<9x384xf32>
    %18 = vector.extract_strided_slice %2 {offsets = [0, 16], sizes = [9, 4], strides = [1, 1]} : vector<9x36xbf16> to vector<9x4xbf16>
    %19 = vector.extract_strided_slice %1 {offsets = [0, 19], sizes = [4, 384], strides = [1, 1]} : vector<4x432xbf16> to vector<4x384xbf16>
    %cst_8 = arith.constant dense<0.000000e+00> : vector<9x384xf32>
    %20 = tpu.matmul %18, %19, %cst_8 {dimension_numbers = #tpu.dot_dimension_numbers<[1], [0], [0], [1], [0, 0, 1, 1], [], []>} : vector<9x4xbf16>, vector<4x384xbf16>, vector<9x384xf32> -> vector<9x384xf32>
    %21 = arith.addf %17, %20 : vector<9x384xf32>
    %22 = vector.extract_strided_slice %2 {offsets = [0, 20], sizes = [9, 4], strides = [1, 1]} : vector<9x36xbf16> to vector<9x4xbf16>
    %23 = vector.extract_strided_slice %1 {offsets = [0, 20], sizes = [4, 384], strides = [1, 1]} : vector<4x432xbf16> to vector<4x384xbf16>
    %cst_9 = arith.constant dense<0.000000e+00> : vector<9x384xf32>
    %24 = tpu.matmul %22, %23, %cst_9 {dimension_numbers = #tpu.dot_dimension_numbers<[1], [0], [0], [1], [0, 0, 1, 1], [], []>} : vector<9x4xbf16>, vector<4x384xbf16>, vector<9x384xf32> -> vector<9x384xf32>
    %25 = arith.addf %21, %24 : vector<9x384xf32>
    %26 = vector.extract_strided_slice %2 {offsets = [0, 24], sizes = [9, 4], strides = [1, 1]} : vector<9x36xbf16> to vector<9x4xbf16>
    %27 = vector.extract_strided_slice %1 {offsets = [0, 36], sizes = [4, 384], strides = [1, 1]} : vector<4x432xbf16> to vector<4x384xbf16>
    %cst_10 = arith.constant dense<0.000000e+00> : vector<9x384xf32>
    %28 = tpu.matmul %26, %27, %cst_10 {dimension_numbers = #tpu.dot_dimension_numbers<[1], [0], [0], [1], [0, 0, 1, 1], [], []>} : vector<9x4xbf16>, vector<4x384xbf16>, vector<9x384xf32> -> vector<9x384xf32>
    %29 = arith.addf %25, %28 : vector<9x384xf32>
    %30 = vector.extract_strided_slice %2 {offsets = [0, 28], sizes = [9, 4], strides = [1, 1]} : vector<9x36xbf16> to vector<9x4xbf16>
    %31 = vector.extract_strided_slice %1 {offsets = [0, 37], sizes = [4, 384], strides = [1, 1]} : vector<4x432xbf16> to vector<4x384xbf16>
    %cst_11 = arith.constant dense<0.000000e+00> : vector<9x384xf32>
    %32 = tpu.matmul %30, %31, %cst_11 {dimension_numbers = #tpu.dot_dimension_numbers<[1], [0], [0], [1], [0, 0, 1, 1], [], []>} : vector<9x4xbf16>, vector<4x384xbf16>, vector<9x384xf32> -> vector<9x384xf32>
    %33 = arith.addf %29, %32 : vector<9x384xf32>
    %34 = vector.extract_strided_slice %2 {offsets = [0, 32], sizes = [9, 4], strides = [1, 1]} : vector<9x36xbf16> to vector<9x4xbf16>
    %35 = vector.extract_strided_slice %1 {offsets = [0, 38], sizes = [4, 384], strides = [1, 1]} : vector<4x432xbf16> to vector<4x384xbf16>
    %cst_12 = arith.constant dense<0.000000e+00> : vector<9x384xf32>
    %36 = tpu.matmul %34, %35, %cst_12 {dimension_numbers = #tpu.dot_dimension_numbers<[1], [0], [0], [1], [0, 0, 1, 1], [], []>} : vector<9x4xbf16>, vector<4x384xbf16>, vector<9x384xf32> -> vector<9x384xf32>
    %37 = arith.addf %33, %36 : vector<9x384xf32>
    %c0_13 = arith.constant 0 : index
    %c0_14 = arith.constant 0 : index
    %38 = vector.load %arg4[%c0_13, %c0_14] : memref<9x1xf32, #tpu.memory_space<vmem>>, vector<9x1xf32>
    %39 = vector.broadcast %38 : vector<9x1xf32> to vector<9x384xf32>
    %40 = arith.mulf %37, %39 : vector<9x384xf32>
    %c0_15 = arith.constant 0 : index
    %c0_16 = arith.constant 0 : index
    %41 = vector.load %arg5[%c0_15, %c0_16] : memref<9x1xf32, #tpu.memory_space<vmem>>, vector<9x1xf32>
    %42 = vector.broadcast %41 : vector<9x1xf32> to vector<9x384xf32>
    %43 = arith.addf %40, %42 : vector<9x384xf32>
    %44 = math.absf %43 : vector<9x384xf32>
    %cst_17 = arith.constant dense<0.000000e+00> : vector<384xf32>
    %45 = vector.multi_reduction <add>, %44, %cst_17 [0] : vector<9x384xf32> to vector<384xf32>
    %46 = vector.shape_cast %45 : vector<384xf32> to vector<1x384xf32>
    %cst_18 = arith.constant dense<0.000000e+00> : vector<384xf32>
    %47 = vector.multi_reduction <add>, %43, %cst_18 [0] : vector<9x384xf32> to vector<384xf32>
    %48 = vector.shape_cast %47 : vector<384xf32> to vector<1x384xf32>
    %49 = tpu.reciprocal %46 {approx = true} : vector<1x384xf32> -> vector<1x384xf32>
    %50 = arith.mulf %46, %49 : vector<1x384xf32>
    %cst_19 = arith.constant 2.000000e+00 : f32
    %51 = vector.broadcast %cst_19 : f32 to vector<1x384xf32>
    %52 = arith.subf %51, %50 : vector<1x384xf32>
    %53 = arith.mulf %49, %52 : vector<1x384xf32>
    %54 = vector.broadcast %53 : vector<1x384xf32> to vector<9x384xf32>
    %55 = arith.mulf %43, %54 : vector<9x384xf32>
    %56 = arith.mulf %48, %53 : vector<1x384xf32>
    %cst_20 = arith.constant 1.000000e+00 : f32
    %57 = vector.broadcast %cst_20 : f32 to vector<1x384xf32>
    %58 = arith.subf %57, %56 : vector<1x384xf32>
    %59 = tpu.iota {dimensions = array<i32: 0>} : vector<9x1xi32>
    %c4_i32 = arith.constant 4 : i32
    %60 = vector.broadcast %c4_i32 : i32 to vector<9x1xi32>
    %61 = arith.cmpi eq, %59, %60 : vector<9x1xi32>
    %62 = vector.shape_cast %61 : vector<9x1xi1> to vector<9x1xi1>
    %63 = vector.broadcast %62 : vector<9x1xi1> to vector<9x384xi1>
    %64 = vector.shape_cast %58 : vector<1x384xf32> to vector<1x384xf32>
    %65 = vector.broadcast %64 : vector<1x384xf32> to vector<9x384xf32>
    %66 = arith.select %63, %65, %55 : vector<9x384xi1>, vector<9x384xf32>
    %c0_21 = arith.constant 0 : index
    %c0_22 = arith.constant 0 : index
    %c0_23 = arith.constant 0 : index
    %67 = vector.load %arg6[%c0_21, %c0_22, %c0_23] : memref<1x9x384xf32, #tpu.memory_space<vmem>>, vector<1x9x384xf32>
    %68 = vector.shape_cast %67 : vector<1x9x384xf32> to vector<9x384xf32>
    %69 = vector.shape_cast %66 : vector<9x384xf32> to vector<1x9x384xf32>
    tpu.vector_store %arg6[%c0_21, %c0_22, %c0_23], %69 {strides = array<i32>} : memref<1x9x384xf32, #tpu.memory_space<vmem>>, vector<1x9x384xf32>,
    return
  }
  func.func @transform_0(%arg0: i32, %arg1: i32) -> (i32, i32, i32, i32) {
    %c0_i32 = arith.constant 0 : i32
    %c0_i32_0 = arith.constant 0 : i32
    %c0_i32_1 = arith.constant 0 : i32
    return %arg0, %arg1, %c0_i32, %c0_i32_0 : i32, i32, i32, i32
  }
  func.func @transform_1(%arg0: i32, %arg1: i32) -> (i32, i32) {
    %c0_i32 = arith.constant 0 : i32
    %c0_i32_0 = arith.constant 0 : i32
    %c0_i32_1 = arith.constant 0 : i32
    return %c0_i32, %c0_i32_0 : i32, i32
  }
  func.func @transform_2(%arg0: i32, %arg1: i32) -> (i32, i32) {
    %c0_i32 = arith.constant 0 : i32
    %c0_i32_0 = arith.constant 0 : i32
    %c0_i32_1 = arith.constant 0 : i32
    return %c0_i32, %c0_i32_0 : i32, i32
  }
  func.func @transform_3(%arg0: i32, %arg1: i32) -> (i32, i32) {
    %c0_i32 = arith.constant 0 : i32
    %c0_i32_0 = arith.constant 0 : i32
    %c0_i32_1 = arith.constant 0 : i32
    return %c0_i32, %c0_i32_0 : i32, i32
  }
  func.func @transform_4(%arg0: i32, %arg1: i32) -> (i32, i32, i32) {
    %c0_i32 = arith.constant 0 : i32
    %c0_i32_0 = arith.constant 0 : i32
    return %arg0, %c0_i32, %arg1 : i32, i32, i32
  }
}

</mosaic_0001>

<llo_original>
// kernel: tpu_custom_call.1
$region0: #{tpu_custom_call.1}
  #allocation0 [shape = 'u32[]', space=smem, size = 0x4, offset = 0x4, fixed_abs, tag = 'smem constant byte address 0x4 - core index']
  #allocation1 [shape = 'u32[144,128]{1,0:T(1,128)}', space=vmem, size = 0x12000, scoped, tag = 'internal scratch']
  %s0 = inlined_call_operand.vmem [shape: bf16[2,1,4,432], index: 0, kind: input, shape index: {}]
  %s1 = inlined_call_operand.vmem [shape: bf16[9,36], index: 1, kind: input, shape index: {}]
  %s2 = inlined_call_operand.vmem [shape: f32[9,1], index: 2, kind: input, shape index: {}]
  %s3 = inlined_call_operand.vmem [shape: f32[9,1], index: 3, kind: input, shape index: {}]
  %s4 = inlined_call_operand.vmem [shape: f32[2,9,384], index: 4, kind: output, shape index: {}]
  %s5 = sld [smem:[#allocation0]]
  $region49: #{tpu_custom_call.1} parent=0
    _
  %s7 = ssub.s32 1, %s5
  %s8 = scalar_select 0, %s7, %s5
  loop: start=0, step=1, limit=4
  $region2: #{tpu_custom_call.1} parent=0 // loop_pre_header
    _
  $region3: #{tpu_custom_call.1} parent=0 // loop_header
    %s10 = sphi 0, %s14
    %p11 = scmp.ge.s32.totalorder %s10, 4
    %s17 = sphi 0, %s29
    %s18 = sphi 0, %s25
    %s19 = sphi 0, %s17
    %s20 = sphi 0, %s18
    %s21 = sphi 0, %s19
    %s22 = sphi 0, %s20
    %s34 = sphi 0, %s36
    %s37 = sphi 0, %s34
    %s38 = sphi 0, %s37
    %s54 = sphi 0, %s38
    %s58 = sphi 0, %s58
    %s60 = sphi 0, %s58
    %s61 = sphi 0, %s60
    %s75 = sphi 0, %s61
    %s79 = sphi 0, %s79
    %s81 = sphi 0, %s79
    %s82 = sphi 0, %s81
    %s96 = sphi 0, %s82
    %s100 = sphi 0, %s100
    %s102 = sphi 0, %s100
    %s103 = sphi 0, %s102
    %s117 = sphi 0, %s103
    %s125 = sphi 0, %s127
    %s128 = sphi 0, %s125
    %s129 = sphi 0, %s128
    %s145 = sphi 0, %s129
  $region4: #{tpu_custom_call.1} parent=0 // loop_header_branch
    %13 = sbr.rel (%p11) target = $region8
  $region5: #{tpu_custom_call.1} parent=0 // loop_body
    %s15 = ssub.s32 %s10, 1
    %s16 = ssub.s32 %s10, 2
    %s23 = sadd.s32 1, %s18
    %p24 = scmp.ge.s32.totalorder %s23, 1
    %s25 = scalar_select %p24, 0, %s23
    %s26 = sadd.s32 1, %s17
    %s27 = scalar_select %p24, %s26, %s17
    %p28 = scmp.ge.s32.totalorder %s27, 2
    %s29 = scalar_select %p28, 0, %s27
    %s30 = ssub.s32 %s17, %s29
    %s31 = ssub.s32 %s18, %s25
    %s32 = sor.u32 %s30, %s31
    %p33 = scmp.eq.s32.totalorder %s32, 0
    %s35 = sadd.s32 %s34, 1
    %s36 = scalar_select %p33, %s34, %s35
    %p39 = pneg %p33
    %p40 = scmp.eq.s32.totalorder %s10, 1
    %p41 = por %p39, %p40
    %p42 = scmp.ne.s32.totalorder %s34, %s37
    %p43 = scmp.eq.s32.totalorder %s10, 0
    %p44 = por %p42, %p43
    %p45 = scmp.ne.s32.totalorder %s34, %s37
    %p46 = scmp.eq.s32.totalorder %s15, 1
    %p47 = por %p45, %p46
    %p48 = scmp.ne.s32.totalorder %s37, %s38
    %p49 = scmp.eq.s32.totalorder %s15, 0
    %p50 = por %p48, %p49
    %p51 = scmp.ne.s32.totalorder %s37, %s38
    %p52 = scmp.eq.s32.totalorder %s16, 1
    %p53 = por %p51, %p52
    %p55 = scmp.ne.s32.totalorder %s38, %s54
    %p56 = scmp.eq.s32.totalorder %s16, 0
    %p57 = por %p55, %p56
    %s59 = sadd.s32 %s58, 1
    %p62 = scmp.eq.s32.totalorder %s10, 1
    %p63 = scmp.ne.s32.totalorder %s58, %s60
    %p64 = scmp.eq.s32.totalorder %s10, 0
    %p65 = por %p63, %p64
    %p66 = scmp.ne.s32.totalorder %s58, %s60
    %p67 = scmp.eq.s32.totalorder %s15, 1
    %p68 = por %p66, %p67
    %p69 = scmp.ne.s32.totalorder %s60, %s61
    %p70 = scmp.eq.s32.totalorder %s15, 0
    %p71 = por %p69, %p70
    %p72 = scmp.ne.s32.totalorder %s60, %s61
    %p73 = scmp.eq.s32.totalorder %s16, 1
    %p74 = por %p72, %p73
    %p76 = scmp.ne.s32.totalorder %s61, %s75
    %p77 = scmp.eq.s32.totalorder %s16, 0
    %p78 = por %p76, %p77
    %s80 = sadd.s32 %s79, 1
    %p83 = scmp.eq.s32.totalorder %s10, 1
    %p84 = scmp.ne.s32.totalorder %s79, %s81
    %p85 = scmp.eq.s32.totalorder %s10, 0
    %p86 = por %p84, %p85
    %p87 = scmp.ne.s32.totalorder %s79, %s81
    %p88 = scmp.eq.s32.totalorder %s15, 1
    %p89 = por %p87, %p88
    %p90 = scmp.ne.s32.totalorder %s81, %s82
    %p91 = scmp.eq.s32.totalorder %s15, 0
    %p92 = por %p90, %p91
    %p93 = scmp.ne.s32.totalorder %s81, %s82
    %p94 = scmp.eq.s32.totalorder %s16, 1
    %p95 = por %p93, %p94
    %p97 = scmp.ne.s32.totalorder %s82, %s96
    %p98 = scmp.eq.s32.totalorder %s16, 0
    %p99 = por %p97, %p98
    %s101 = sadd.s32 %s100, 1
    %p104 = scmp.eq.s32.totalorder %s10, 1
    %p105 = scmp.ne.s32.totalorder %s100, %s102
    %p106 = scmp.eq.s32.totalorder %s10, 0
    %p107 = por %p105, %p106
    %p108 = scmp.ne.s32.totalorder %s100, %s102
    %p109 = scmp.eq.s32.totalorder %s15, 1
    %p110 = por %p108, %p109
    %p111 = scmp.ne.s32.totalorder %s102, %s103
    %p112 = scmp.eq.s32.totalorder %s15, 0
    %p113 = por %p111, %p112
    %p114 = scmp.ne.s32.totalorder %s102, %s103
    %p115 = scmp.eq.s32.totalorder %s16, 1
    %p116 = por %p114, %p115
    %p118 = scmp.ne.s32.totalorder %s103, %s117
    %p119 = scmp.eq.s32.totalorder %s16, 0
    %p120 = por %p118, %p119
    %s121 = ssub.s32 %s17, %s29
    %s122 = ssub.s32 %s18, %s25
    %s123 = sor.u32 %s121, %s122
    %p124 = scmp.eq.s32.totalorder %s123, 0
    %s126 = sadd.s32 %s125, 1
    %s127 = scalar_select %p124, %s125, %s126
    %p130 = pneg %p124
    %p131 = scmp.eq.s32.totalorder %s10, 1
    %p132 = por %p130, %p131
    %p133 = scmp.ne.s32.totalorder %s125, %s128
    %p134 = scmp.eq.s32.totalorder %s10, 0
    %p135 = por %p133, %p134
    %p136 = scmp.ne.s32.totalorder %s125, %s128
    %p137 = scmp.eq.s32.totalorder %s15, 1
    %p138 = por %p136, %p137
    %p139 = scmp.ne.s32.totalorder %s128, %s129
    %p140 = scmp.eq.s32.totalorder %s15, 0
    %p141 = por %p139, %p140
    %p142 = scmp.ne.s32.totalorder %s128, %s129
    %p143 = scmp.eq.s32.totalorder %s16, 1
    %p144 = por %p142, %p143
    %p146 = scmp.ne.s32.totalorder %s129, %s145
    %p147 = scmp.eq.s32.totalorder %s16, 0
    %p148 = por %p146, %p147
    %p149 = scmp.le.s32.totalorder 1, %s10
    %p150 = scmp.lt.s32.totalorder %s10, 3
    %p151 = pnand %p149, %p150
    %p152 = pneg %p151
    // Predicated region
    $region9: #{tpu_custom_call.1} parent=5 // pred_check
      _
    $region10: #{tpu_custom_call.1} parent=5 // pred_check_branch
      %154 = sbr.rel (%p151) target = $region12
    $region11: #{tpu_custom_call.1} parent=5 // pred_region
      %s155 = ssub.s32 %s10, 1
      // Predicated region
      $region13: #{tpu_custom_call.1} parent=11 // pred_check
        %p156 = pneg %p71
      $region14: #{tpu_custom_call.1} parent=11 // pred_check_branch
        %158 = sbr.rel (%p156) target = $region16
      $region15: #{tpu_custom_call.1} parent=11 // pred_region
        _
      $region16: #{tpu_custom_call.1} parent=11 // pred_fallthru
        _
      // Predicated region
      $region17: #{tpu_custom_call.1} parent=11 // pred_check
        %p159 = pneg %p92
      $region18: #{tpu_custom_call.1} parent=11 // pred_check_branch
        %161 = sbr.rel (%p159) target = $region20
      $region19: #{tpu_custom_call.1} parent=11 // pred_region
        _
      $region20: #{tpu_custom_call.1} parent=11 // pred_fallthru
        _
      // Predicated region
      $region21: #{tpu_custom_call.1} parent=11 // pred_check
        %p162 = pneg %p113
      $region22: #{tpu_custom_call.1} parent=11 // pred_check_branch
        %164 = sbr.rel (%p162) target = $region24
      $region23: #{tpu_custom_call.1} parent=11 // pred_region
        _
      $region24: #{tpu_custom_call.1} parent=11 // pred_fallthru
        _
    $region12: #{tpu_custom_call.1} parent=5 // pred_fallthru
      _
    %p165 = scmp.lt.s32.totalorder %s10, 2
    // Predicated region
    $region25: #{tpu_custom_call.1} parent=5 // pred_check
      %p166 = pneg %p165
    $region26: #{tpu_custom_call.1} parent=5 // pred_check_branch
      %168 = sbr.rel (%p166) target = $region28
    $region27: #{tpu_custom_call.1} parent=5 // pred_region
      // Predicated region
      $region29: #{tpu_custom_call.1} parent=27 // pred_check
        %p169 = pneg %p44
      $region30: #{tpu_custom_call.1} parent=27 // pred_check_branch
        %171 = sbr.rel (%p169) target = $region32
      $region31: #{tpu_custom_call.1} parent=27 // pred_region
        %p172 = scmp.lt.s32.totalorder %s17, 1
        %s173 = scalar_select %p172, %s17, 1
        %p174 = scmp.lt.s32.totalorder %s18, 0
        %s175 = scalar_select %p174, %s18, 0
        %s176 = smul.addr %s175, 4
        %s177 = smul.addr %s173, 4
        %s178 = sadd.s32 %s176, %s177
        %s179 = smul.addr %s178, 2
        %s180 = scalar_lea.vmem %s0, %s179
      $region32: #{tpu_custom_call.1} parent=27 // pred_fallthru
        _
    $region28: #{tpu_custom_call.1} parent=5 // pred_fallthru
      _
    %p181 = scmp.le.s32.totalorder 1, %s10
    %p182 = scmp.lt.s32.totalorder %s10, 3
    %p183 = pnand %p181, %p182
    %p184 = pneg %p183
    // Predicated region
    $region33: #{tpu_custom_call.1} parent=5 // pred_check
      _
    $region34: #{tpu_custom_call.1} parent=5 // pred_check_branch
      %186 = sbr.rel (%p183) target = $region36
    $region35: #{tpu_custom_call.1} parent=5 // pred_region
      %s187 = ssub.s32 %s10, 1
      %p188 = scmp.lt.s32.totalorder %s19, 1
      %s189 = scalar_select %p188, %s19, 1
      %p190 = scmp.lt.s32.totalorder %s20, 0
      %s191 = scalar_select %p190, %s20, 0
      %s192 = smul.addr %s191, 4
      %s193 = smul.addr %s189, 4
      %s194 = sadd.s32 %s192, %s193
      %s195 = smul.addr %s194, 2
      %s196 = scalar_lea.vmem %s0, %s195
      %p197 = pneg %p50
      %p198 = pneg %p47
      %p199 = pneg %p71
      %p200 = pneg %p68
      %p201 = pneg %p92
      %p202 = pneg %p89
      %p203 = pneg %p113
      %p204 = pneg %p110
      %p205 = pneg %p141
      %p206 = pneg %p138
      %s207 = smul.u32 3, %s20
      %p208 = scmp.lt.s32.totalorder %s19, 1
      %s209 = scalar_select %p208, %s19, 1
      %p210 = scmp.lt.s32.totalorder %s207, 2
      %s211 = scalar_select %p210, %s207, 2
      %s212 = smul.addr %s209, 6
      %s213 = sadd.s32 %s211, %s212
      %s214 = smul.addr %s213, 8
      %s215 = scalar_lea.vmem %s4, %s214
      %p216 = scmp.lt.s32.totalorder %s19, 1
      %s217 = scalar_select %p216, %s19, 1
      %p218 = scmp.lt.s32.totalorder %s20, 0
      %s219 = scalar_select %p218, %s20, 0
      %s220 = smul.addr %s219, 4
      %s221 = smul.addr %s217, 4
      %s222 = sadd.s32 %s220, %s221
      %s223 = smul.addr %s222, 2
      %s224 = scalar_lea.vmem %s0, %s223
      %s225 = smul.u32 3, %s20
      %p226 = scmp.lt.s32.totalorder %s19, 1
      %s227 = scalar_select %p226, %s19, 1
      %p228 = scmp.lt.s32.totalorder %s225, 2
      %s229 = scalar_select %p228, %s225, 2
      %s230 = smul.addr %s227, 6
      %s231 = sadd.s32 %s229, %s230
      %s232 = smul.addr %s231, 8
      %s233 = scalar_lea.vmem %s4, %s232
      %s234 = smul.u32 3, %s20
      %v236 = vld [vmem:[%s224] sm:$0xff]
      %v237 = vld [vmem:[%s1] sm:$0xf]
      %v238 = vld [vmem:[%s1 + $0x4] sm:$0x1]
      %v241 = vunpack.c.l.b16 %v237
      %v242 = vunpack.c.l.b16 %v238
      %v243 = vpack.c.b16 %v242, %v241
      %244 = vrot.lane.b32.xlu0 %v243, 124
      %v245 = vpop.permute.xlu0 %244
      %v247 = vcombine.high %v236, %v236
      %v249 = vunpack.c.l.s4 1983009808
      %v250 = vunpack.c.0.s8 %v249
      %v251 = vlaneseq
      %v252 = vshrl.u32 %v251, 7
      %v253 = vsub.s32 %v250, %v252
      %v254 = vrot.slane %v236, %v253
      %v256 = vunpack.c.l.s4 1983009808
      %v257 = vunpack.c.0.s8 %v256
      %v258 = vlaneseq
      %v259 = vshrl.u32 %v258, 7
      %v260 = vsub.s32 %v257, %v259
      %v261 = vrot.slane %v247, %v260
      %v262 = vcombine.high %v254, %v254
      %v263 = vcombine.high %v261, %v261
      %264 = vrot.lane.b32.xlu0 %v254, 127
      %v265 = vpop.permute.xlu0 %264
      %266 = vrot.lane.b32.xlu0 %v262, 127
      %v267 = vpop.permute.xlu0 %266
      %268 = vrot.lane.b32.xlu0 %v261, 127
      %v269 = vpop.permute.xlu0 %268
      %270 = vrot.lane.b32.xlu0 %v263, 127
      %v271 = vpop.permute.xlu0 %270
      %vm272 = vcmask 1039360
      %v273 = vsel %vm272, %v265, %v267
      %v274 = vsel %vm272, %v267, %v269
      %v275 = vsel %vm272, %v269, %v271
      %vm276 = vcmask 31744
      %v278 = vsel %vm276, %v245, 0
      %vm280 = vcmask 1041408
      %v282 = vsel %vm280, %v273, 0
      %v285 = vsel %vm280, %v274, 0
      %v288 = vsel %vm280, %v275, 0
      %290 = vmatprep.subr.bf16.mxu0 0
      %291 = vmatpush1.bf16.msra.mxu0 0
      %292 = vmatprep.subr.bf16.mxu0 0
      %293 = vmatpush1.bf16.msra.mxu0 0
      %294 = vmatprep.subr.bf16.mxu0 0
      %295 = vmatpush1.bf16.msra.mxu0 0
      %296 = vmatprep.subr.bf16.mxu0 0
      %297 = vmatpush1.bf16.msra.mxu0 0
      %298 = vmatprep.subr.bf16.mxu0 0
      %299 = vmatpush1.bf16.msra.mxu0 0
      %300 = vmatprep.subr.bf16.mxu0 0
      %301 = vmatpush1.bf16.msra.mxu0 0
      %302 = vmatprep.subr.bf16.mxu0 0
      %303 = vmatpush1.bf16.msra.mxu0 0
      %304 = vmatprep.subr.bf16.mxu0 %v285
      %305 = vmatpush1.bf16.msra.mxu0 %v282
      %306 = vmatprep.subr.bf16.mxu0 0
      %307 = vmatpush2.bf16.msra.mxu0 0
      %308 = vmatprep.subr.bf16.mxu0 0
      %309 = vmatpush2.bf16.msra.mxu0 0
      %310 = vmatprep.subr.bf16.mxu0 0
      %311 = vmatpush2.bf16.msra.mxu0 0
      %312 = vmatprep.subr.bf16.mxu0 0
      %313 = vmatpush2.bf16.msra.mxu0 0
      %314 = vmatprep.subr.bf16.mxu0 0
      %315 = vmatpush2.bf16.msra.mxu0 0
      %316 = vmatprep.subr.bf16.mxu0 0
      %317 = vmatpush2.bf16.msra.mxu0 0
      %318 = vmatprep.subr.bf16.mxu0 0
      %319 = vmatpush2.bf16.msra.mxu0 0
      %320 = vmatprep.subr.bf16.mxu0 0
      %321 = vmatpush2.bf16.msra.mxu0 0
      %322 = vmatprep.mubr.bf16.mxu0 0
      %323 = vmatmul.mubr.bf16.gmra.mxu0 %v278
      %v324 = vpop.f32.mrf.mxu0
      %v325 = vadd.f32 0.0, %v324
      %v326 = vpop.f32.mrf.mxu0
      %v327 = vadd.f32 0.0, %v326
      %v328 = vpop.f32.mrf.mxu0
      %v329 = vadd.f32 0.0, %v328
      %v330 = vpop.f32.mrf.mxu0
      %v331 = vadd.f32 0.0, %v330
      %332 = vdwg.mxu0
      %333 = vmatprep.subr.bf16.mxu0 0
      %334 = vmatpush1.bf16.msra.mxu0 0
      %335 = vmatprep.subr.bf16.mxu0 0
      %336 = vmatpush1.bf16.msra.mxu0 0
      %337 = vmatprep.subr.bf16.mxu0 0
      %338 = vmatpush1.bf16.msra.mxu0 0
      %339 = vmatprep.subr.bf16.mxu0 0
      %340 = vmatpush1.bf16.msra.mxu0 0
      %341 = vmatprep.subr.bf16.mxu0 0
      %342 = vmatpush1.bf16.msra.mxu0 0
      %343 = vmatprep.subr.bf16.mxu0 0
      %344 = vmatpush1.bf16.msra.mxu0 0
      %345 = vmatprep.subr.bf16.mxu0 0
      %346 = vmatpush1.bf16.msra.mxu0 0
      %347 = vmatprep.subr.bf16.mxu0 0
      %348 = vmatpush1.bf16.msra.mxu0 %v288
      %349 = vmatprep.subr.bf16.mxu0 0
      %350 = vmatpush2.bf16.msra.mxu0 0
      %351 = vmatprep.subr.bf16.mxu0 0
      %352 = vmatpush2.bf16.msra.mxu0 0
      %353 = vmatprep.subr.bf16.mxu0 0
      %354 = vmatpush2.bf16.msra.mxu0 0
      %355 = vmatprep.subr.bf16.mxu0 0
      %356 = vmatpush2.bf16.msra.mxu0 0
      %357 = vmatprep.subr.bf16.mxu0 0
      %358 = vmatpush2.bf16.msra.mxu0 0
      %359 = vmatprep.subr.bf16.mxu0 0
      %360 = vmatpush2.bf16.msra.mxu0 0
      %361 = vmatprep.subr.bf16.mxu0 0
      %362 = vmatpush2.bf16.msra.mxu0 0
      %363 = vmatprep.subr.bf16.mxu0 0
      %364 = vmatpush2.bf16.msra.mxu0 0
      %365 = vmatprep.mubr.bf16.mxu0 0
      %366 = vmatmul.mubr.bf16.gmra.mxu0 %v278
      %v367 = vpop.f32.mrf.mxu0
      %v368 = vadd.f32 0.0, %v367
      %v369 = vpop.f32.mrf.mxu0
      %v370 = vpop.f32.mrf.mxu0
      %v371 = vadd.f32 0.0, %v370
      %v372 = vpop.f32.mrf.mxu0
      %373 = vdwg.mxu0
      %v375 = vsel %vm276, %v243, 0
      %v378 = vsel %vm280, %v254, 0
      %v381 = vsel %vm280, %v262, 0
      %v384 = vsel %vm280, %v261, 0
      %386 = vmatprep.subr.bf16.mxu0 0
      %387 = vmatpush1.bf16.msra.mxu0 0
      %388 = vmatprep.subr.bf16.mxu0 0
      %389 = vmatpush1.bf16.msra.mxu0 0
      %390 = vmatprep.subr.bf16.mxu0 0
      %391 = vmatpush1.bf16.msra.mxu0 0
      %392 = vmatprep.subr.bf16.mxu0 0
      %393 = vmatpush1.bf16.msra.mxu0 0
      %394 = vmatprep.subr.bf16.mxu0 0
      %395 = vmatpush1.bf16.msra.mxu0 0
      %396 = vmatprep.subr.bf16.mxu0 0
      %397 = vmatpush1.bf16.msra.mxu0 0
      %398 = vmatprep.subr.bf16.mxu0 0
      %399 = vmatpush1.bf16.msra.mxu0 0
      %400 = vmatprep.subr.bf16.mxu0 %v381
      %401 = vmatpush1.bf16.msra.mxu0 %v378
      %402 = vmatprep.subr.bf16.mxu0 0
      %403 = vmatpush2.bf16.msra.mxu0 0
      %404 = vmatprep.subr.bf16.mxu0 0
      %405 = vmatpush2.bf16.msra.mxu0 0
      %406 = vmatprep.subr.bf16.mxu0 0
      %407 = vmatpush2.bf16.msra.mxu0 0
      %408 = vmatprep.subr.bf16.mxu0 0
      %409 = vmatpush2.bf16.msra.mxu0 0
      %410 = vmatprep.subr.bf16.mxu0 0
      %411 = vmatpush2.bf16.msra.mxu0 0
      %412 = vmatprep.subr.bf16.mxu0 0
      %413 = vmatpush2.bf16.msra.mxu0 0
      %414 = vmatprep.subr.bf16.mxu0 0
      %415 = vmatpush2.bf16.msra.mxu0 0
      %416 = vmatprep.subr.bf16.mxu0 0
      %417 = vmatpush2.bf16.msra.mxu0 0
      %418 = vmatprep.mubr.bf16.mxu0 0
      %419 = vmatmul.mubr.bf16.gmra.mxu0 %v375
      %v420 = vpop.f32.mrf.mxu0
      %v421 = vadd.f32 %v325, %v420
      %v422 = vpop.f32.mrf.mxu0
      %v423 = vadd.f32 %v327, %v422
      %v424 = vpop.f32.mrf.mxu0
      %v425 = vadd.f32 %v329, %v424
      %v426 = vpop.f32.mrf.mxu0
      %v427 = vadd.f32 %v331, %v426
      %428 = vdwg.mxu0
      %429 = vmatprep.subr.bf16.mxu0 0
      %430 = vmatpush1.bf16.msra.mxu0 0
      %431 = vmatprep.subr.bf16.mxu0 0
      %432 = vmatpush1.bf16.msra.mxu0 0
      %433 = vmatprep.subr.bf16.mxu0 0
      %434 = vmatpush1.bf16.msra.mxu0 0
      %435 = vmatprep.subr.bf16.mxu0 0
      %436 = vmatpush1.bf16.msra.mxu0 0
      %437 = vmatprep.subr.bf16.mxu0 0
      %438 = vmatpush1.bf16.msra.mxu0 0
      %439 = vmatprep.subr.bf16.mxu0 0
      %440 = vmatpush1.bf16.msra.mxu0 0
      %441 = vmatprep.subr.bf16.mxu0 0
      %442 = vmatpush1.bf16.msra.mxu0 0
      %443 = vmatprep.subr.bf16.mxu0 0
      %444 = vmatpush1.bf16.msra.mxu0 %v384
      %445 = vmatprep.subr.bf16.mxu0 0
      %446 = vmatpush2.bf16.msra.mxu0 0
      %447 = vmatprep.subr.bf16.mxu0 0
      %448 = vmatpush2.bf16.msra.mxu0 0
      %449 = vmatprep.subr.bf16.mxu0 0
      %450 = vmatpush2.bf16.msra.mxu0 0
      %451 = vmatprep.subr.bf16.mxu0 0
      %452 = vmatpush2.bf16.msra.mxu0 0
      %453 = vmatprep.subr.bf16.mxu0 0
      %454 = vmatpush2.bf16.msra.mxu0 0
      %455 = vmatprep.subr.bf16.mxu0 0
      %456 = vmatpush2.bf16.msra.mxu0 0
      %457 = vmatprep.subr.bf16.mxu0 0
      %458 = vmatpush2.bf16.msra.mxu0 0
      %459 = vmatprep.subr.bf16.mxu0 0
      %460 = vmatpush2.bf16.msra.mxu0 0
      %461 = vmatprep.mubr.bf16.mxu0 0
      %462 = vmatmul.mubr.bf16.gmra.mxu0 %v375
      %v463 = vpop.f32.mrf.mxu0
      %v464 = vadd.f32 %v368, %v463
      %v465 = vpop.f32.mrf.mxu0
      %v466 = vpop.f32.mrf.mxu0
      %v467 = vadd.f32 %v371, %v466
      %v468 = vpop.f32.mrf.mxu0
      %469 = vdwg.mxu0
      %470 = vrot.lane.b32.xlu0 %v243, 120
      %v471 = vpop.permute.xlu0 %470
      %472 = vrot.lane.b32.xlu0 %v254, 126
      %v473 = vpop.permute.xlu0 %472
      %474 = vrot.lane.b32.xlu0 %v262, 126
      %v475 = vpop.permute.xlu0 %474
      %476 = vrot.lane.b32.xlu0 %v261, 126
      %v477 = vpop.permute.xlu0 %476
      %478 = vrot.lane.b32.xlu0 %v263, 126
      %v479 = vpop.permute.xlu0 %478
      %vm480 = vcmask 1031168
      %v481 = vsel %vm480, %v473, %v475
      %v482 = vsel %vm480, %v475, %v477
      %v483 = vsel %vm480, %v477, %v479
      %v485 = vsel %vm276, %v471, 0
      %v488 = vsel %vm280, %v481, 0
      %v491 = vsel %vm280, %v482, 0
      %v494 = vsel %vm280, %v483, 0
      %496 = vmatprep.subr.bf16.mxu0 0
      %497 = vmatpush1.bf16.msra.mxu0 0
      %498 = vmatprep.subr.bf16.mxu0 0
      %499 = vmatpush1.bf16.msra.mxu0 0
      %500 = vmatprep.subr.bf16.mxu0 0
      %501 = vmatpush1.bf16.msra.mxu0 0
      %502 = vmatprep.subr.bf16.mxu0 0
      %503 = vmatpush1.bf16.msra.mxu0 0
      %504 = vmatprep.subr.bf16.mxu0 0
      %505 = vmatpush1.bf16.msra.mxu0 0
      %506 = vmatprep.subr.bf16.mxu0 0
      %507 = vmatpush1.bf16.msra.mxu0 0
      %508 = vmatprep.subr.bf16.mxu0 0
      %509 = vmatpush1.bf16.msra.mxu0 0
      %510 = vmatprep.subr.bf16.mxu0 %v491
      %511 = vmatpush1.bf16.msra.mxu0 %v488
      %512 = vmatprep.subr.bf16.mxu0 0
      %513 = vmatpush2.bf16.msra.mxu0 0
      %514 = vmatprep.subr.bf16.mxu0 0
      %515 = vmatpush2.bf16.msra.mxu0 0
      %516 = vmatprep.subr.bf16.mxu0 0
      %517 = vmatpush2.bf16.msra.mxu0 0
      %518 = vmatprep.subr.bf16.mxu0 0
      %519 = vmatpush2.bf16.msra.mxu0 0
      %520 = vmatprep.subr.bf16.mxu0 0
      %521 = vmatpush2.bf16.msra.mxu0 0
      %522 = vmatprep.subr.bf16.mxu0 0
      %523 = vmatpush2.bf16.msra.mxu0 0
      %524 = vmatprep.subr.bf16.mxu0 0
      %525 = vmatpush2.bf16.msra.mxu0 0
      %526 = vmatprep.subr.bf16.mxu0 0
      %527 = vmatpush2.bf16.msra.mxu0 0
      %528 = vmatprep.mubr.bf16.mxu0 0
      %529 = vmatmul.mubr.bf16.gmra.mxu0 %v485
      %v530 = vpop.f32.mrf.mxu0
      %v531 = vadd.f32 0.0, %v530
      %v532 = vpop.f32.mrf.mxu0
      %v533 = vadd.f32 0.0, %v532
      %v534 = vpop.f32.mrf.mxu0
      %v535 = vadd.f32 0.0, %v534
      %v536 = vpop.f32.mrf.mxu0
      %v537 = vadd.f32 0.0, %v536
      %538 = vdwg.mxu0
      %539 = vmatprep.subr.bf16.mxu0 0
      %540 = vmatpush1.bf16.msra.mxu0 0
      %541 = vmatprep.subr.bf16.mxu0 0
      %542 = vmatpush1.bf16.msra.mxu0 0
      %543 = vmatprep.subr.bf16.mxu0 0
      %544 = vmatpush1.bf16.msra.mxu0 0
      %545 = vmatprep.subr.bf16.mxu0 0
      %546 = vmatpush1.bf16.msra.mxu0 0
      %547 = vmatprep.subr.bf16.mxu0 0
      %548 = vmatpush1.bf16.msra.mxu0 0
      %549 = vmatprep.subr.bf16.mxu0 0
      %550 = vmatpush1.bf16.msra.mxu0 0
      %551 = vmatprep.subr.bf16.mxu0 0
      %552 = vmatpush1.bf16.msra.mxu0 0
      %553 = vmatprep.subr.bf16.mxu0 0
      %554 = vmatpush1.bf16.msra.mxu0 %v494
      %555 = vmatprep.subr.bf16.mxu0 0
      %556 = vmatpush2.bf16.msra.mxu0 0
      %557 = vmatprep.subr.bf16.mxu0 0
      %558 = vmatpush2.bf16.msra.mxu0 0
      %559 = vmatprep.subr.bf16.mxu0 0
      %560 = vmatpush2.bf16.msra.mxu0 0
      %561 = vmatprep.subr.bf16.mxu0 0
      %562 = vmatpush2.bf16.msra.mxu0 0
      %563 = vmatprep.subr.bf16.mxu0 0
      %564 = vmatpush2.bf16.msra.mxu0 0
      %565 = vmatprep.subr.bf16.mxu0 0
      %566 = vmatpush2.bf16.msra.mxu0 0
      %567 = vmatprep.subr.bf16.mxu0 0
      %568 = vmatpush2.bf16.msra.mxu0 0
      %569 = vmatprep.subr.bf16.mxu0 0
      %570 = vmatpush2.bf16.msra.mxu0 0
      %571 = vmatprep.mubr.bf16.mxu0 0
      %572 = vmatmul.mubr.bf16.gmra.mxu0 %v485
      %v573 = vpop.f32.mrf.mxu0
      %v574 = vadd.f32 0.0, %v573
      %v575 = vpop.f32.mrf.mxu0
      %v576 = vpop.f32.mrf.mxu0
      %v577 = vadd.f32 0.0, %v576
      %v578 = vpop.f32.mrf.mxu0
      %579 = vdwg.mxu0
      %v580 = vadd.f32 %v421, %v531
      %v581 = vadd.f32 %v423, %v533
      %v582 = vadd.f32 %v464, %v574
      %v583 = vadd.f32 %v425, %v535
      %v584 = vadd.f32 %v427, %v537
      %v585 = vadd.f32 %v467, %v577
      %586 = vrot.lane.b32.xlu0 %v243, 116
      %v587 = vpop.permute.xlu0 %586
      %588 = vrot.lane.b32.xlu0 %v254, 110
      %v589 = vpop.permute.xlu0 %588
      %590 = vrot.lane.b32.xlu0 %v262, 110
      %v591 = vpop.permute.xlu0 %590
      %592 = vrot.lane.b32.xlu0 %v261, 110
      %v593 = vpop.permute.xlu0 %592
      %594 = vrot.lane.b32.xlu0 %v263, 110
      %v595 = vpop.permute.xlu0 %594
      %vm596 = vcmask 900096
      %v597 = vsel %vm596, %v589, %v591
      %v598 = vsel %vm596, %v591, %v593
      %v599 = vsel %vm596, %v593, %v595
      %v601 = vsel %vm276, %v587, 0
      %v604 = vsel %vm280, %v597, 0
      %v607 = vsel %vm280, %v598, 0
      %v610 = vsel %vm280, %v599, 0
      %612 = vmatprep.subr.bf16.mxu0 0
      %613 = vmatpush1.bf16.msra.mxu0 0
      %614 = vmatprep.subr.bf16.mxu0 0
      %615 = vmatpush1.bf16.msra.mxu0 0
      %616 = vmatprep.subr.bf16.mxu0 0
      %617 = vmatpush1.bf16.msra.mxu0 0
      %618 = vmatprep.subr.bf16.mxu0 0
      %619 = vmatpush1.bf16.msra.mxu0 0
      %620 = vmatprep.subr.bf16.mxu0 0
      %621 = vmatpush1.bf16.msra.mxu0 0
      %622 = vmatprep.subr.bf16.mxu0 0
      %623 = vmatpush1.bf16.msra.mxu0 0
      %624 = vmatprep.subr.bf16.mxu0 0
      %625 = vmatpush1.bf16.msra.mxu0 0
      %626 = vmatprep.subr.bf16.mxu0 %v607
      %627 = vmatpush1.bf16.msra.mxu0 %v604
      %628 = vmatprep.subr.bf16.mxu0 0
      %629 = vmatpush2.bf16.msra.mxu0 0
      %630 = vmatprep.subr.bf16.mxu0 0
      %631 = vmatpush2.bf16.msra.mxu0 0
      %632 = vmatprep.subr.bf16.mxu0 0
      %633 = vmatpush2.bf16.msra.mxu0 0
      %634 = vmatprep.subr.bf16.mxu0 0
      %635 = vmatpush2.bf16.msra.mxu0 0
      %636 = vmatprep.subr.bf16.mxu0 0
      %637 = vmatpush2.bf16.msra.mxu0 0
      %638 = vmatprep.subr.bf16.mxu0 0
      %639 = vmatpush2.bf16.msra.mxu0 0
      %640 = vmatprep.subr.bf16.mxu0 0
      %641 = vmatpush2.bf16.msra.mxu0 0
      %642 = vmatprep.subr.bf16.mxu0 0
      %643 = vmatpush2.bf16.msra.mxu0 0
      %644 = vmatprep.mubr.bf16.mxu0 0
      %645 = vmatmul.mubr.bf16.gmra.mxu0 %v601
      %v646 = vpop.f32.mrf.mxu0
      %v647 = vadd.f32 0.0, %v646
      %v648 = vpop.f32.mrf.mxu0
      %v649 = vadd.f32 0.0, %v648
      %v650 = vpop.f32.mrf.mxu0
      %v651 = vadd.f32 0.0, %v650
      %v652 = vpop.f32.mrf.mxu0
      %v653 = vadd.f32 0.0, %v652
      %654 = vdwg.mxu0
      %655 = vmatprep.subr.bf16.mxu0 0
      %656 = vmatpush1.bf16.msra.mxu0 0
      %657 = vmatprep.subr.bf16.mxu0 0
      %658 = vmatpush1.bf16.msra.mxu0 0
      %659 = vmatprep.subr.bf16.mxu0 0
      %660 = vmatpush1.bf16.msra.mxu0 0
      %661 = vmatprep.subr.bf16.mxu0 0
      %662 = vmatpush1.bf16.msra.mxu0 0
      %663 = vmatprep.subr.bf16.mxu0 0
      %664 = vmatpush1.bf16.msra.mxu0 0
      %665 = vmatprep.subr.bf16.mxu0 0
      %666 = vmatpush1.bf16.msra.mxu0 0
      %667 = vmatprep.subr.bf16.mxu0 0
      %668 = vmatpush1.bf16.msra.mxu0 0
      %669 = vmatprep.subr.bf16.mxu0 0
      %670 = vmatpush1.bf16.msra.mxu0 %v610
      %671 = vmatprep.subr.bf16.mxu0 0
      %672 = vmatpush2.bf16.msra.mxu0 0
      %673 = vmatprep.subr.bf16.mxu0 0
      %674 = vmatpush2.bf16.msra.mxu0 0
      %675 = vmatprep.subr.bf16.mxu0 0
      %676 = vmatpush2.bf16.msra.mxu0 0
      %677 = vmatprep.subr.bf16.mxu0 0
      %678 = vmatpush2.bf16.msra.mxu0 0
      %679 = vmatprep.subr.bf16.mxu0 0
      %680 = vmatpush2.bf16.msra.mxu0 0
      %681 = vmatprep.subr.bf16.mxu0 0
      %682 = vmatpush2.bf16.msra.mxu0 0
      %683 = vmatprep.subr.bf16.mxu0 0
      %684 = vmatpush2.bf16.msra.mxu0 0
      %685 = vmatprep.subr.bf16.mxu0 0
      %686 = vmatpush2.bf16.msra.mxu0 0
      %687 = vmatprep.mubr.bf16.mxu0 0
      %688 = vmatmul.mubr.bf16.gmra.mxu0 %v601
      %v689 = vpop.f32.mrf.mxu0
      %v690 = vadd.f32 0.0, %v689
      %v691 = vpop.f32.mrf.mxu0
      %v692 = vpop.f32.mrf.mxu0
      %v693 = vadd.f32 0.0, %v692
      %v694 = vpop.f32.mrf.mxu0
      %695 = vdwg.mxu0
      %v696 = vadd.f32 %v580, %v647
      %v697 = vadd.f32 %v581, %v649
      %v698 = vadd.f32 %v582, %v690
      %v699 = vadd.f32 %v583, %v651
      %v700 = vadd.f32 %v584, %v653
      %v701 = vadd.f32 %v585, %v693
      %702 = vrot.lane.b32.xlu0 %v243, 112
      %v703 = vpop.permute.xlu0 %702
      %704 = vrot.lane.b32.xlu0 %v254, 109
      %v705 = vpop.permute.xlu0 %704
      %706 = vrot.lane.b32.xlu0 %v262, 109
      %v707 = vpop.permute.xlu0 %706
      %708 = vrot.lane.b32.xlu0 %v261, 109
      %v709 = vpop.permute.xlu0 %708
      %710 = vrot.lane.b32.xlu0 %v263, 109
      %v711 = vpop.permute.xlu0 %710
      %vm712 = vcmask 891904
      %v713 = vsel %vm712, %v705, %v707
      %v714 = vsel %vm712, %v707, %v709
      %v715 = vsel %vm712, %v709, %v711
      %v717 = vsel %vm276, %v703, 0
      %v720 = vsel %vm280, %v713, 0
      %v723 = vsel %vm280, %v714, 0
      %v726 = vsel %vm280, %v715, 0
      %728 = vmatprep.subr.bf16.mxu0 0
      %729 = vmatpush1.bf16.msra.mxu0 0
      %730 = vmatprep.subr.bf16.mxu0 0
      %731 = vmatpush1.bf16.msra.mxu0 0
      %732 = vmatprep.subr.bf16.mxu0 0
      %733 = vmatpush1.bf16.msra.mxu0 0
      %734 = vmatprep.subr.bf16.mxu0 0
      %735 = vmatpush1.bf16.msra.mxu0 0
      %736 = vmatprep.subr.bf16.mxu0 0
      %737 = vmatpush1.bf16.msra.mxu0 0
      %738 = vmatprep.subr.bf16.mxu0 0
      %739 = vmatpush1.bf16.msra.mxu0 0
      %740 = vmatprep.subr.bf16.mxu0 0
      %741 = vmatpush1.bf16.msra.mxu0 0
      %742 = vmatprep.subr.bf16.mxu0 %v723
      %743 = vmatpush1.bf16.msra.mxu0 %v720
      %744 = vmatprep.subr.bf16.mxu0 0
      %745 = vmatpush2.bf16.msra.mxu0 0
      %746 = vmatprep.subr.bf16.mxu0 0
      %747 = vmatpush2.bf16.msra.mxu0 0
      %748 = vmatprep.subr.bf16.mxu0 0
      %749 = vmatpush2.bf16.msra.mxu0 0
      %750 = vmatprep.subr.bf16.mxu0 0
      %751 = vmatpush2.bf16.msra.mxu0 0
      %752 = vmatprep.subr.bf16.mxu0 0
      %753 = vmatpush2.bf16.msra.mxu0 0
      %754 = vmatprep.subr.bf16.mxu0 0
      %755 = vmatpush2.bf16.msra.mxu0 0
      %756 = vmatprep.subr.bf16.mxu0 0
      %757 = vmatpush2.bf16.msra.mxu0 0
      %758 = vmatprep.subr.bf16.mxu0 0
      %759 = vmatpush2.bf16.msra.mxu0 0
      %760 = vmatprep.mubr.bf16.mxu0 0
      %761 = vmatmul.mubr.bf16.gmra.mxu0 %v717
      %v762 = vpop.f32.mrf.mxu0
      %v763 = vadd.f32 0.0, %v762
      %v764 = vpop.f32.mrf.mxu0
      %v765 = vadd.f32 0.0, %v764
      %v766 = vpop.f32.mrf.mxu0
      %v767 = vadd.f32 0.0, %v766
      %v768 = vpop.f32.mrf.mxu0
      %v769 = vadd.f32 0.0, %v768
      %770 = vdwg.mxu0
      %771 = vmatprep.subr.bf16.mxu0 0
      %772 = vmatpush1.bf16.msra.mxu0 0
      %773 = vmatprep.subr.bf16.mxu0 0
      %774 = vmatpush1.bf16.msra.mxu0 0
      %775 = vmatprep.subr.bf16.mxu0 0
      %776 = vmatpush1.bf16.msra.mxu0 0
      %777 = vmatprep.subr.bf16.mxu0 0
      %778 = vmatpush1.bf16.msra.mxu0 0
      %779 = vmatprep.subr.bf16.mxu0 0
      %780 = vmatpush1.bf16.msra.mxu0 0
      %781 = vmatprep.subr.bf16.mxu0 0
      %782 = vmatpush1.bf16.msra.mxu0 0
      %783 = vmatprep.subr.bf16.mxu0 0
      %784 = vmatpush1.bf16.msra.mxu0 0
      %785 = vmatprep.subr.bf16.mxu0 0
      %786 = vmatpush1.bf16.msra.mxu0 %v726
      %787 = vmatprep.subr.bf16.mxu0 0
      %788 = vmatpush2.bf16.msra.mxu0 0
      %789 = vmatprep.subr.bf16.mxu0 0
      %790 = vmatpush2.bf16.msra.mxu0 0
      %791 = vmatprep.subr.bf16.mxu0 0
      %792 = vmatpush2.bf16.msra.mxu0 0
      %793 = vmatprep.subr.bf16.mxu0 0
      %794 = vmatpush2.bf16.msra.mxu0 0
      %795 = vmatprep.subr.bf16.mxu0 0
      %796 = vmatpush2.bf16.msra.mxu0 0
      %797 = vmatprep.subr.bf16.mxu0 0
      %798 = vmatpush2.bf16.msra.mxu0 0
      %799 = vmatprep.subr.bf16.mxu0 0
      %800 = vmatpush2.bf16.msra.mxu0 0
      %801 = vmatprep.subr.bf16.mxu0 0
      %802 = vmatpush2.bf16.msra.mxu0 0
      %803 = vmatprep.mubr.bf16.mxu0 0
      %804 = vmatmul.mubr.bf16.gmra.mxu0 %v717
      %v805 = vpop.f32.mrf.mxu0
      %v806 = vadd.f32 0.0, %v805
      %v807 = vpop.f32.mrf.mxu0
      %v808 = vpop.f32.mrf.mxu0
      %v809 = vadd.f32 0.0, %v808
      %v810 = vpop.f32.mrf.mxu0
      %811 = vdwg.mxu0
      %v812 = vadd.f32 %v696, %v763
      %v813 = vadd.f32 %v697, %v765
      %v814 = vadd.f32 %v698, %v806
      %v815 = vadd.f32 %v699, %v767
      %v816 = vadd.f32 %v700, %v769
      %v817 = vadd.f32 %v701, %v809
      %818 = vrot.lane.b32.xlu0 %v243, 108
      %v819 = vpop.permute.xlu0 %818
      %820 = vrot.lane.b32.xlu0 %v254, 108
      %v821 = vpop.permute.xlu0 %820
      %822 = vrot.lane.b32.xlu0 %v262, 108
      %v823 = vpop.permute.xlu0 %822
      %824 = vrot.lane.b32.xlu0 %v261, 108
      %v825 = vpop.permute.xlu0 %824
      %826 = vrot.lane.b32.xlu0 %v263, 108
      %v827 = vpop.permute.xlu0 %826
      %vm828 = vcmask 883712
      %v829 = vsel %vm828, %v821, %v823
      %v830 = vsel %vm828, %v823, %v825
      %v831 = vsel %vm828, %v825, %v827
      %v833 = vsel %vm276, %v819, 0
      %v836 = vsel %vm280, %v829, 0
      %v839 = vsel %vm280, %v830, 0
      %v842 = vsel %vm280, %v831, 0
      %844 = vmatprep.subr.bf16.mxu0 0
      %845 = vmatpush1.bf16.msra.mxu0 0
      %846 = vmatprep.subr.bf16.mxu0 0
      %847 = vmatpush1.bf16.msra.mxu0 0
      %848 = vmatprep.subr.bf16.mxu0 0
      %849 = vmatpush1.bf16.msra.mxu0 0
      %850 = vmatprep.subr.bf16.mxu0 0
      %851 = vmatpush1.bf16.msra.mxu0 0
      %852 = vmatprep.subr.bf16.mxu0 0
      %853 = vmatpush1.bf16.msra.mxu0 0
      %854 = vmatprep.subr.bf16.mxu0 0
      %855 = vmatpush1.bf16.msra.mxu0 0
      %856 = vmatprep.subr.bf16.mxu0 0
      %857 = vmatpush1.bf16.msra.mxu0 0
      %858 = vmatprep.subr.bf16.mxu0 %v839
      %859 = vmatpush1.bf16.msra.mxu0 %v836
      %860 = vmatprep.subr.bf16.mxu0 0
      %861 = vmatpush2.bf16.msra.mxu0 0
      %862 = vmatprep.subr.bf16.mxu0 0
      %863 = vmatpush2.bf16.msra.mxu0 0
      %864 = vmatprep.subr.bf16.mxu0 0
      %865 = vmatpush2.bf16.msra.mxu0 0
      %866 = vmatprep.subr.bf16.mxu0 0
      %867 = vmatpush2.bf16.msra.mxu0 0
      %868 = vmatprep.subr.bf16.mxu0 0
      %869 = vmatpush2.bf16.msra.mxu0 0
      %870 = vmatprep.subr.bf16.mxu0 0
      %871 = vmatpush2.bf16.msra.mxu0 0
      %872 = vmatprep.subr.bf16.mxu0 0
      %873 = vmatpush2.bf16.msra.mxu0 0
      %874 = vmatprep.subr.bf16.mxu0 0
      %875 = vmatpush2.bf16.msra.mxu0 0
      %876 = vmatprep.mubr.bf16.mxu0 0
      %877 = vmatmul.mubr.bf16.gmra.mxu0 %v833
      %v878 = vpop.f32.mrf.mxu0
      %v879 = vadd.f32 0.0, %v878
      %v880 = vpop.f32.mrf.mxu0
      %v881 = vadd.f32 0.0, %v880
      %v882 = vpop.f32.mrf.mxu0
      %v883 = vadd.f32 0.0, %v882
      %v884 = vpop.f32.mrf.mxu0
      %v885 = vadd.f32 0.0, %v884
      %886 = vdwg.mxu0
      %887 = vmatprep.subr.bf16.mxu0 0
      %888 = vmatpush1.bf16.msra.mxu0 0
      %889 = vmatprep.subr.bf16.mxu0 0
      %890 = vmatpush1.bf16.msra.mxu0 0
      %891 = vmatprep.subr.bf16.mxu0 0
      %892 = vmatpush1.bf16.msra.mxu0 0
      %893 = vmatprep.subr.bf16.mxu0 0
      %894 = vmatpush1.bf16.msra.mxu0 0
      %895 = vmatprep.subr.bf16.mxu0 0
      %896 = vmatpush1.bf16.msra.mxu0 0
      %897 = vmatprep.subr.bf16.mxu0 0
      %898 = vmatpush1.bf16.msra.mxu0 0
      %899 = vmatprep.subr.bf16.mxu0 0
      %900 = vmatpush1.bf16.msra.mxu0 0
      %901 = vmatprep.subr.bf16.mxu0 0
      %902 = vmatpush1.bf16.msra.mxu0 %v842
      %903 = vmatprep.subr.bf16.mxu0 0
      %904 = vmatpush2.bf16.msra.mxu0 0
      %905 = vmatprep.subr.bf16.mxu0 0
      %906 = vmatpush2.bf16.msra.mxu0 0
      %907 = vmatprep.subr.bf16.mxu0 0
      %908 = vmatpush2.bf16.msra.mxu0 0
      %909 = vmatprep.subr.bf16.mxu0 0
      %910 = vmatpush2.bf16.msra.mxu0 0
      %911 = vmatprep.subr.bf16.mxu0 0
      %912 = vmatpush2.bf16.msra.mxu0 0
      %913 = vmatprep.subr.bf16.mxu0 0
      %914 = vmatpush2.bf16.msra.mxu0 0
      %915 = vmatprep.subr.bf16.mxu0 0
      %916 = vmatpush2.bf16.msra.mxu0 0
      %917 = vmatprep.subr.bf16.mxu0 0
      %918 = vmatpush2.bf16.msra.mxu0 0
      %919 = vmatprep.mubr.bf16.mxu0 0
      %920 = vmatmul.mubr.bf16.gmra.mxu0 %v833
      %v921 = vpop.f32.mrf.mxu0
      %v922 = vadd.f32 0.0, %v921
      %v923 = vpop.f32.mrf.mxu0
      %v924 = vpop.f32.mrf.mxu0
      %v925 = vadd.f32 0.0, %v924
      %v926 = vpop.f32.mrf.mxu0
      %927 = vdwg.mxu0
      %v928 = vadd.f32 %v812, %v879
      %v929 = vadd.f32 %v813, %v881
      %v930 = vadd.f32 %v814, %v922
      %v931 = vadd.f32 %v815, %v883
      %v932 = vadd.f32 %v816, %v885
      %v933 = vadd.f32 %v817, %v925
      %934 = vrot.lane.b32.xlu0 %v243, 104
      %v935 = vpop.permute.xlu0 %934
      %936 = vrot.lane.b32.xlu0 %v254, 92
      %v937 = vpop.permute.xlu0 %936
      %938 = vrot.lane.b32.xlu0 %v262, 92
      %v939 = vpop.permute.xlu0 %938
      %940 = vrot.lane.b32.xlu0 %v261, 92
      %v941 = vpop.permute.xlu0 %940
      %942 = vrot.lane.b32.xlu0 %v263, 92
      %v943 = vpop.permute.xlu0 %942
      %vm944 = vcmask 752640
      %v945 = vsel %vm944, %v937, %v939
      %v946 = vsel %vm944, %v939, %v941
      %v947 = vsel %vm944, %v941, %v943
      %v949 = vsel %vm276, %v935, 0
      %v952 = vsel %vm280, %v945, 0
      %v955 = vsel %vm280, %v946, 0
      %v958 = vsel %vm280, %v947, 0
      %960 = vmatprep.subr.bf16.mxu0 0
      %961 = vmatpush1.bf16.msra.mxu0 0
      %962 = vmatprep.subr.bf16.mxu0 0
      %963 = vmatpush1.bf16.msra.mxu0 0
      %964 = vmatprep.subr.bf16.mxu0 0
      %965 = vmatpush1.bf16.msra.mxu0 0
      %966 = vmatprep.subr.bf16.mxu0 0
      %967 = vmatpush1.bf16.msra.mxu0 0
      %968 = vmatprep.subr.bf16.mxu0 0
      %969 = vmatpush1.bf16.msra.mxu0 0
      %970 = vmatprep.subr.bf16.mxu0 0
      %971 = vmatpush1.bf16.msra.mxu0 0
      %972 = vmatprep.subr.bf16.mxu0 0
      %973 = vmatpush1.bf16.msra.mxu0 0
      %974 = vmatprep.subr.bf16.mxu0 %v955
      %975 = vmatpush1.bf16.msra.mxu0 %v952
      %976 = vmatprep.subr.bf16.mxu0 0
      %977 = vmatpush2.bf16.msra.mxu0 0
      %978 = vmatprep.subr.bf16.mxu0 0
      %979 = vmatpush2.bf16.msra.mxu0 0
      %980 = vmatprep.subr.bf16.mxu0 0
      %981 = vmatpush2.bf16.msra.mxu0 0
      %982 = vmatprep.subr.bf16.mxu0 0
      %983 = vmatpush2.bf16.msra.mxu0 0
      %984 = vmatprep.subr.bf16.mxu0 0
      %985 = vmatpush2.bf16.msra.mxu0 0
      %986 = vmatprep.subr.bf16.mxu0 0
      %987 = vmatpush2.bf16.msra.mxu0 0
      %988 = vmatprep.subr.bf16.mxu0 0
      %989 = vmatpush2.bf16.msra.mxu0 0
      %990 = vmatprep.subr.bf16.mxu0 0
      %991 = vmatpush2.bf16.msra.mxu0 0
      %992 = vmatprep.mubr.bf16.mxu0 0
      %993 = vmatmul.mubr.bf16.gmra.mxu0 %v949
      %v994 = vpop.f32.mrf.mxu0
      %v995 = vadd.f32 0.0, %v994
      %v996 = vpop.f32.mrf.mxu0
      %v997 = vadd.f32 0.0, %v996
      %v998 = vpop.f32.mrf.mxu0
      %v999 = vadd.f32 0.0, %v998
      %v1000 = vpop.f32.mrf.mxu0
      %v1001 = vadd.f32 0.0, %v1000
      %1002 = vdwg.mxu0
      %1003 = vmatprep.subr.bf16.mxu0 0
      %1004 = vmatpush1.bf16.msra.mxu0 0
      %1005 = vmatprep.subr.bf16.mxu0 0
      %1006 = vmatpush1.bf16.msra.mxu0 0
      %1007 = vmatprep.subr.bf16.mxu0 0
      %1008 = vmatpush1.bf16.msra.mxu0 0
      %1009 = vmatprep.subr.bf16.mxu0 0
      %1010 = vmatpush1.bf16.msra.mxu0 0
      %1011 = vmatprep.subr.bf16.mxu0 0
      %1012 = vmatpush1.bf16.msra.mxu0 0
      %1013 = vmatprep.subr.bf16.mxu0 0
      %1014 = vmatpush1.bf16.msra.mxu0 0
      %1015 = vmatprep.subr.bf16.mxu0 0
      %1016 = vmatpush1.bf16.msra.mxu0 0
      %1017 = vmatprep.subr.bf16.mxu0 0
      %1018 = vmatpush1.bf16.msra.mxu0 %v958
      %1019 = vmatprep.subr.bf16.mxu0 0
      %1020 = vmatpush2.bf16.msra.mxu0 0
      %1021 = vmatprep.subr.bf16.mxu0 0
      %1022 = vmatpush2.bf16.msra.mxu0 0
      %1023 = vmatprep.subr.bf16.mxu0 0
      %1024 = vmatpush2.bf16.msra.mxu0 0
      %1025 = vmatprep.subr.bf16.mxu0 0
      %1026 = vmatpush2.bf16.msra.mxu0 0
      %1027 = vmatprep.subr.bf16.mxu0 0
      %1028 = vmatpush2.bf16.msra.mxu0 0
      %1029 = vmatprep.subr.bf16.mxu0 0
      %1030 = vmatpush2.bf16.msra.mxu0 0
      %1031 = vmatprep.subr.bf16.mxu0 0
      %1032 = vmatpush2.bf16.msra.mxu0 0
      %1033 = vmatprep.subr.bf16.mxu0 0
      %1034 = vmatpush2.bf16.msra.mxu0 0
      %1035 = vmatprep.mubr.bf16.mxu0 0
      %1036 = vmatmul.mubr.bf16.gmra.mxu0 %v949
      %v1037 = vpop.f32.mrf.mxu0
      %v1038 = vadd.f32 0.0, %v1037
      %v1039 = vpop.f32.mrf.mxu0
      %v1040 = vpop.f32.mrf.mxu0
      %v1041 = vadd.f32 0.0, %v1040
      %v1042 = vpop.f32.mrf.mxu0
      %1043 = vdwg.mxu0
      %v1044 = vadd.f32 %v928, %v995
      %v1045 = vadd.f32 %v929, %v997
      %v1046 = vadd.f32 %v930, %v1038
      %v1047 = vadd.f32 %v931, %v999
      %v1048 = vadd.f32 %v932, %v1001
      %v1049 = vadd.f32 %v933, %v1041
      %1050 = vrot.lane.b32.xlu0 %v243, 100
      %v1051 = vpop.permute.xlu0 %1050
      %1052 = vrot.lane.b32.xlu0 %v254, 91
      %v1053 = vpop.permute.xlu0 %1052
      %1054 = vrot.lane.b32.xlu0 %v262, 91
      %v1055 = vpop.permute.xlu0 %1054
      %1056 = vrot.lane.b32.xlu0 %v261, 91
      %v1057 = vpop.permute.xlu0 %1056
      %1058 = vrot.lane.b32.xlu0 %v263, 91
      %v1059 = vpop.permute.xlu0 %1058
      %vm1060 = vcmask 744448
      %v1061 = vsel %vm1060, %v1053, %v1055
      %v1062 = vsel %vm1060, %v1055, %v1057
      %v1063 = vsel %vm1060, %v1057, %v1059
      %v1065 = vsel %vm276, %v1051, 0
      %v1068 = vsel %vm280, %v1061, 0
      %v1071 = vsel %vm280, %v1062, 0
      %v1074 = vsel %vm280, %v1063, 0
      %1076 = vmatprep.subr.bf16.mxu0 0
      %1077 = vmatpush1.bf16.msra.mxu0 0
      %1078 = vmatprep.subr.bf16.mxu0 0
      %1079 = vmatpush1.bf16.msra.mxu0 0
      %1080 = vmatprep.subr.bf16.mxu0 0
      %1081 = vmatpush1.bf16.msra.mxu0 0
      %1082 = vmatprep.subr.bf16.mxu0 0
      %1083 = vmatpush1.bf16.msra.mxu0 0
      %1084 = vmatprep.subr.bf16.mxu0 0
      %1085 = vmatpush1.bf16.msra.mxu0 0
      %1086 = vmatprep.subr.bf16.mxu0 0
      %1087 = vmatpush1.bf16.msra.mxu0 0
      %1088 = vmatprep.subr.bf16.mxu0 0
      %1089 = vmatpush1.bf16.msra.mxu0 0
      %1090 = vmatprep.subr.bf16.mxu0 %v1071
      %1091 = vmatpush1.bf16.msra.mxu0 %v1068
      %1092 = vmatprep.subr.bf16.mxu0 0
      %1093 = vmatpush2.bf16.msra.mxu0 0
      %1094 = vmatprep.subr.bf16.mxu0 0
      %1095 = vmatpush2.bf16.msra.mxu0 0
      %1096 = vmatprep.subr.bf16.mxu0 0
      %1097 = vmatpush2.bf16.msra.mxu0 0
      %1098 = vmatprep.subr.bf16.mxu0 0
      %1099 = vmatpush2.bf16.msra.mxu0 0
      %1100 = vmatprep.subr.bf16.mxu0 0
      %1101 = vmatpush2.bf16.msra.mxu0 0
      %1102 = vmatprep.subr.bf16.mxu0 0
      %1103 = vmatpush2.bf16.msra.mxu0 0
      %1104 = vmatprep.subr.bf16.mxu0 0
      %1105 = vmatpush2.bf16.msra.mxu0 0
      %1106 = vmatprep.subr.bf16.mxu0 0
      %1107 = vmatpush2.bf16.msra.mxu0 0
      %1108 = vmatprep.mubr.bf16.mxu0 0
      %1109 = vmatmul.mubr.bf16.gmra.mxu0 %v1065
      %v1110 = vpop.f32.mrf.mxu0
      %v1111 = vadd.f32 0.0, %v1110
      %v1112 = vpop.f32.mrf.mxu0
      %v1113 = vadd.f32 0.0, %v1112
      %v1114 = vpop.f32.mrf.mxu0
      %v1115 = vadd.f32 0.0, %v1114
      %v1116 = vpop.f32.mrf.mxu0
      %v1117 = vadd.f32 0.0, %v1116
      %1118 = vdwg.mxu0
      %1119 = vmatprep.subr.bf16.mxu0 0
      %1120 = vmatpush1.bf16.msra.mxu0 0
      %1121 = vmatprep.subr.bf16.mxu0 0
      %1122 = vmatpush1.bf16.msra.mxu0 0
      %1123 = vmatprep.subr.bf16.mxu0 0
      %1124 = vmatpush1.bf16.msra.mxu0 0
      %1125 = vmatprep.subr.bf16.mxu0 0
      %1126 = vmatpush1.bf16.msra.mxu0 0
      %1127 = vmatprep.subr.bf16.mxu0 0
      %1128 = vmatpush1.bf16.msra.mxu0 0
      %1129 = vmatprep.subr.bf16.mxu0 0
      %1130 = vmatpush1.bf16.msra.mxu0 0
      %1131 = vmatprep.subr.bf16.mxu0 0
      %1132 = vmatpush1.bf16.msra.mxu0 0
      %1133 = vmatprep.subr.bf16.mxu0 0
      %1134 = vmatpush1.bf16.msra.mxu0 %v1074
      %1135 = vmatprep.subr.bf16.mxu0 0
      %1136 = vmatpush2.bf16.msra.mxu0 0
      %1137 = vmatprep.subr.bf16.mxu0 0
      %1138 = vmatpush2.bf16.msra.mxu0 0
      %1139 = vmatprep.subr.bf16.mxu0 0
      %1140 = vmatpush2.bf16.msra.mxu0 0
      %1141 = vmatprep.subr.bf16.mxu0 0
      %1142 = vmatpush2.bf16.msra.mxu0 0
      %1143 = vmatprep.subr.bf16.mxu0 0
      %1144 = vmatpush2.bf16.msra.mxu0 0
      %1145 = vmatprep.subr.bf16.mxu0 0
      %1146 = vmatpush2.bf16.msra.mxu0 0
      %1147 = vmatprep.subr.bf16.mxu0 0
      %1148 = vmatpush2.bf16.msra.mxu0 0
      %1149 = vmatprep.subr.bf16.mxu0 0
      %1150 = vmatpush2.bf16.msra.mxu0 0
      %1151 = vmatprep.mubr.bf16.mxu0 0
      %1152 = vmatmul.mubr.bf16.gmra.mxu0 %v1065
      %v1153 = vpop.f32.mrf.mxu0
      %v1154 = vadd.f32 0.0, %v1153
      %v1155 = vpop.f32.mrf.mxu0
      %v1156 = vpop.f32.mrf.mxu0
      %v1157 = vadd.f32 0.0, %v1156
      %v1158 = vpop.f32.mrf.mxu0
      %1159 = vdwg.mxu0
      %v1160 = vadd.f32 %v1044, %v1111
      %v1161 = vadd.f32 %v1045, %v1113
      %v1162 = vadd.f32 %v1046, %v1154
      %v1163 = vadd.f32 %v1047, %v1115
      %v1164 = vadd.f32 %v1048, %v1117
      %v1165 = vadd.f32 %v1049, %v1157
      %1166 = vrot.lane.b32.xlu0 %v243, 96
      %v1167 = vpop.permute.xlu0 %1166
      %1168 = vrot.lane.b32.xlu0 %v254, 90
      %v1169 = vpop.permute.xlu0 %1168
      %1170 = vrot.lane.b32.xlu0 %v262, 90
      %v1171 = vpop.permute.xlu0 %1170
      %1172 = vrot.lane.b32.xlu0 %v261, 90
      %v1173 = vpop.permute.xlu0 %1172
      %1174 = vrot.lane.b32.xlu0 %v263, 90
      %v1175 = vpop.permute.xlu0 %1174
      %vm1176 = vcmask 736256
      %v1177 = vsel %vm1176, %v1169, %v1171
      %v1178 = vsel %vm1176, %v1171, %v1173
      %v1179 = vsel %vm1176, %v1173, %v1175
      %v1181 = vsel %vm276, %v1167, 0
      %v1184 = vsel %vm280, %v1177, 0
      %v1187 = vsel %vm280, %v1178, 0
      %v1190 = vsel %vm280, %v1179, 0
      %1192 = vmatprep.subr.bf16.mxu0 0
      %1193 = vmatpush1.bf16.msra.mxu0 0
      %1194 = vmatprep.subr.bf16.mxu0 0
      %1195 = vmatpush1.bf16.msra.mxu0 0
      %1196 = vmatprep.subr.bf16.mxu0 0
      %1197 = vmatpush1.bf16.msra.mxu0 0
      %1198 = vmatprep.subr.bf16.mxu0 0
      %1199 = vmatpush1.bf16.msra.mxu0 0
      %1200 = vmatprep.subr.bf16.mxu0 0
      %1201 = vmatpush1.bf16.msra.mxu0 0
      %1202 = vmatprep.subr.bf16.mxu0 0
      %1203 = vmatpush1.bf16.msra.mxu0 0
      %1204 = vmatprep.subr.bf16.mxu0 0
      %1205 = vmatpush1.bf16.msra.mxu0 0
      %1206 = vmatprep.subr.bf16.mxu0 %v1187
      %1207 = vmatpush1.bf16.msra.mxu0 %v1184
      %1208 = vmatprep.subr.bf16.mxu0 0
      %1209 = vmatpush2.bf16.msra.mxu0 0
      %1210 = vmatprep.subr.bf16.mxu0 0
      %1211 = vmatpush2.bf16.msra.mxu0 0
      %1212 = vmatprep.subr.bf16.mxu0 0
      %1213 = vmatpush2.bf16.msra.mxu0 0
      %1214 = vmatprep.subr.bf16.mxu0 0
      %1215 = vmatpush2.bf16.msra.mxu0 0
      %1216 = vmatprep.subr.bf16.mxu0 0
      %1217 = vmatpush2.bf16.msra.mxu0 0
      %1218 = vmatprep.subr.bf16.mxu0 0
      %1219 = vmatpush2.bf16.msra.mxu0 0
      %1220 = vmatprep.subr.bf16.mxu0 0
      %1221 = vmatpush2.bf16.msra.mxu0 0
      %1222 = vmatprep.subr.bf16.mxu0 0
      %1223 = vmatpush2.bf16.msra.mxu0 0
      %1224 = vmatprep.mubr.bf16.mxu0 0
      %1225 = vmatmul.mubr.bf16.gmra.mxu0 %v1181
      %v1226 = vpop.f32.mrf.mxu0
      %v1227 = vadd.f32 0.0, %v1226
      %v1228 = vpop.f32.mrf.mxu0
      %v1229 = vadd.f32 0.0, %v1228
      %v1230 = vpop.f32.mrf.mxu0
      %v1231 = vadd.f32 0.0, %v1230
      %v1232 = vpop.f32.mrf.mxu0
      %v1233 = vadd.f32 0.0, %v1232
      %1234 = vdwg.mxu0
      %1235 = vmatprep.subr.bf16.mxu0 0
      %1236 = vmatpush1.bf16.msra.mxu0 0
      %1237 = vmatprep.subr.bf16.mxu0 0
      %1238 = vmatpush1.bf16.msra.mxu0 0
      %1239 = vmatprep.subr.bf16.mxu0 0
      %1240 = vmatpush1.bf16.msra.mxu0 0
      %1241 = vmatprep.subr.bf16.mxu0 0
      %1242 = vmatpush1.bf16.msra.mxu0 0
      %1243 = vmatprep.subr.bf16.mxu0 0
      %1244 = vmatpush1.bf16.msra.mxu0 0
      %1245 = vmatprep.subr.bf16.mxu0 0
      %1246 = vmatpush1.bf16.msra.mxu0 0
      %1247 = vmatprep.subr.bf16.mxu0 0
      %1248 = vmatpush1.bf16.msra.mxu0 0
      %1249 = vmatprep.subr.bf16.mxu0 0
      %1250 = vmatpush1.bf16.msra.mxu0 %v1190
      %1251 = vmatprep.subr.bf16.mxu0 0
      %1252 = vmatpush2.bf16.msra.mxu0 0
      %1253 = vmatprep.subr.bf16.mxu0 0
      %1254 = vmatpush2.bf16.msra.mxu0 0
      %1255 = vmatprep.subr.bf16.mxu0 0
      %1256 = vmatpush2.bf16.msra.mxu0 0
      %1257 = vmatprep.subr.bf16.mxu0 0
      %1258 = vmatpush2.bf16.msra.mxu0 0
      %1259 = vmatprep.subr.bf16.mxu0 0
      %1260 = vmatpush2.bf16.msra.mxu0 0
      %1261 = vmatprep.subr.bf16.mxu0 0
      %1262 = vmatpush2.bf16.msra.mxu0 0
      %1263 = vmatprep.subr.bf16.mxu0 0
      %1264 = vmatpush2.bf16.msra.mxu0 0
      %1265 = vmatprep.subr.bf16.mxu0 0
      %1266 = vmatpush2.bf16.msra.mxu0 0
      %1267 = vmatprep.mubr.bf16.mxu0 0
      %1268 = vmatmul.mubr.bf16.gmra.mxu0 %v1181
      %v1269 = vpop.f32.mrf.mxu0
      %v1270 = vadd.f32 0.0, %v1269
      %v1271 = vpop.f32.mrf.mxu0
      %v1272 = vpop.f32.mrf.mxu0
      %v1273 = vadd.f32 0.0, %v1272
      %v1274 = vpop.f32.mrf.mxu0
      %1275 = vdwg.mxu0
      %v1276 = vadd.f32 %v1160, %v1227
      %v1277 = vadd.f32 %v1161, %v1229
      %v1278 = vadd.f32 %v1162, %v1270
      %v1279 = vadd.f32 %v1163, %v1231
      %v1280 = vadd.f32 %v1164, %v1233
      %v1281 = vadd.f32 %v1165, %v1273
      %v1282 = vld [vmem:[%s2] sm:$0xff]
      %v1283 = vld [vmem:[%s2 + $0x8] sm:$0x1]
      %1285 = vset.pattern.permute.xlu0 0
      %1286 = vperm.xlu0 %1285, %v1282
      %v1287 = vpop.permute.xlu0 %1286
      %1290 = vset.pattern.permute.xlu0 0
      %1291 = vperm.xlu0 %1290, %v1283
      %v1292 = vpop.permute.xlu0 %1291
      %v1294 = vmul.f32 %v1276, %v1287
      %v1295 = vmul.f32 %v1277, %v1287
      %v1296 = vmul.f32 %v1278, %v1287
      %v1297 = vmul.f32 %v1279, %v1292
      %v1298 = vmul.f32 %v1280, %v1292
      %v1299 = vmul.f32 %v1281, %v1292
      %v1300 = vld [vmem:[%s3] sm:$0xff]
      %v1301 = vld [vmem:[%s3 + $0x8] sm:$0x1]
      %1303 = vset.pattern.permute.xlu0 0
      %1304 = vperm.xlu0 %1303, %v1300
      %v1305 = vpop.permute.xlu0 %1304
      %1308 = vset.pattern.permute.xlu0 0
      %1309 = vperm.xlu0 %1308, %v1301
      %v1310 = vpop.permute.xlu0 %1309
      %v1312 = vadd.f32 %v1294, %v1305
      %v1313 = vadd.f32 %v1295, %v1305
      %v1314 = vadd.f32 %v1296, %v1305
      %v1315 = vadd.f32 %v1297, %v1310
      %v1316 = vadd.f32 %v1298, %v1310
      %v1317 = vadd.f32 %v1299, %v1310
      %v1318 = vand.u32 2147483647, %v1312
      %v1319 = vand.u32 2147483647, %v1313
      %v1320 = vand.u32 2147483647, %v1314
      %v1321 = vand.u32 2147483647, %v1315
      %v1322 = vand.u32 2147483647, %v1316
      %v1323 = vand.u32 2147483647, %v1317
      %vm1324 = vcmask 1040384
      %v1325 = vsel %vm1324, %v1321, 0.0
      %v1326 = vadd.f32 %v1318, %v1325
      %v1327 = vrot.slane %v1326, 4
      %v1328 = vadd.f32 %v1326, %v1327
      %v1329 = vrot.slane %v1328, 2
      %v1330 = vadd.f32 %v1328, %v1329
      %v1331 = vrot.slane %v1330, 1
      %v1332 = vadd.f32 %v1330, %v1331
      %v1333 = vsel %vm1324, %v1322, 0.0
      %v1334 = vadd.f32 %v1319, %v1333
      %v1335 = vrot.slane %v1334, 4
      %v1336 = vadd.f32 %v1334, %v1335
      %v1337 = vrot.slane %v1336, 2
      %v1338 = vadd.f32 %v1336, %v1337
      %v1339 = vrot.slane %v1338, 1
      %v1340 = vadd.f32 %v1338, %v1339
      %v1341 = vsel %vm1324, %v1323, 0.0
      %v1342 = vadd.f32 %v1320, %v1341
      %v1343 = vrot.slane %v1342, 4
      %v1344 = vadd.f32 %v1342, %v1343
      %v1345 = vrot.slane %v1344, 2
      %v1346 = vadd.f32 %v1344, %v1345
      %v1347 = vrot.slane %v1346, 1
      %v1348 = vadd.f32 %v1346, %v1347
      %v1349 = vsel %vm1324, %v1315, 0.0
      %v1350 = vadd.f32 %v1312, %v1349
      %v1351 = vrot.slane %v1350, 4
      %v1352 = vadd.f32 %v1350, %v1351
      %v1353 = vrot.slane %v1352, 2
      %v1354 = vadd.f32 %v1352, %v1353
      %v1355 = vrot.slane %v1354, 1
      %v1356 = vadd.f32 %v1354, %v1355
      %v1357 = vsel %vm1324, %v1316, 0.0
      %v1358 = vadd.f32 %v1313, %v1357
      %v1359 = vrot.slane %v1358, 4
      %v1360 = vadd.f32 %v1358, %v1359
      %v1361 = vrot.slane %v1360, 2
      %v1362 = vadd.f32 %v1360, %v1361
      %v1363 = vrot.slane %v1362, 1
      %v1364 = vadd.f32 %v1362, %v1363
      %v1365 = vsel %vm1324, %v1317, 0.0
      %v1366 = vadd.f32 %v1314, %v1365
      %v1367 = vrot.slane %v1366, 4
      %v1368 = vadd.f32 %v1366, %v1367
      %v1369 = vrot.slane %v1368, 2
      %v1370 = vadd.f32 %v1368, %v1369
      %v1371 = vrot.slane %v1370, 1
      %v1372 = vadd.f32 %v1370, %v1371
      %v1373 = vrcp.pop %v1332
      %v1374 = vrcp.pop %v1340
      %v1375 = vrcp.pop %v1348
      %v1376 = vmul.f32 %v1332, %v1373
      %v1377 = vmul.f32 %v1340, %v1374
      %v1378 = vmul.f32 %v1348, %v1375
      %v1379 = vsub.f32 2.0, %v1376
      %v1380 = vsub.f32 2.0, %v1377
      %v1381 = vsub.f32 2.0, %v1378
      %v1382 = vmul.f32 %v1373, %v1379
      %v1383 = vmul.f32 %v1374, %v1380
      %v1384 = vmul.f32 %v1375, %v1381
      %v1385 = vmul.f32 %v1312, %v1382
      %v1386 = vmul.f32 %v1313, %v1383
      %v1387 = vmul.f32 %v1314, %v1384
      %v1388 = vmul.f32 %v1315, %v1382
      %v1389 = vmul.f32 %v1316, %v1383
      %v1390 = vmul.f32 %v1317, %v1384
      %v1391 = vmul.f32 %v1356, %v1382
      %v1392 = vmul.f32 %v1364, %v1383
      %v1393 = vmul.f32 %v1372, %v1384
      %v1394 = vsub.f32 1.0, %v1391
      %v1395 = vsub.f32 1.0, %v1392
      %v1396 = vsub.f32 1.0, %v1393
      %v1397 = vlaneseq
      %v1398 = vshrl.u32 %v1397, 7
      %v1399 = vadd.s32 %v1398, 8
      %vm1400 = vcmp.eq.s32.totalorder %v1398, 4
      %vm1401 = vcmp.eq.s32.totalorder %v1399, 4
      %v1402 = vsel %vm1400, 1, 0
      %v1403 = vsel %vm1401, 1, 0
      %vm1404 = vcmp.eq.s32.totalorder %v1402, 1
      %vm1405 = vcmp.eq.s32.totalorder %v1403, 1
      %v1406 = vsel %vm1404, %v1394, %v1385
      %v1407 = vsel %vm1404, %v1395, %v1386
      %v1408 = vsel %vm1404, %v1396, %v1387
      %v1409 = vsel %vm1405, %v1394, %v1388
      %v1410 = vsel %vm1405, %v1395, %v1389
      %v1411 = vsel %vm1405, %v1396, %v1390
      %1412 = vst [vmem:[%s233] sm:$0xff] %v1406
      %1413 = vst [vmem:[%s233 + $0x8] sm:$0xff] %v1407
      %1414 = vst [vmem:[%s233 + $0x10] sm:$0xff] %v1408
      %1415 = vst [vmem:[%s233 + $0x18] sm:$0x1] %v1409
      %1416 = vst [vmem:[%s233 + $0x20] sm:$0x1] %v1410
      %1417 = vst [vmem:[%s233 + $0x28] sm:$0x1] %v1411
      %s1418 = smul.u32 3, %s20
      %p1419 = scmp.lt.s32.totalorder %s19, 1
      %s1420 = scalar_select %p1419, %s19, 1
      %p1421 = scmp.lt.s32.totalorder %s1418, 2
      %s1422 = scalar_select %p1421, %s1418, 2
      %s1423 = smul.addr %s1420, 6
      %s1424 = sadd.s32 %s1422, %s1423
      %s1425 = smul.addr %s1424, 8
      %s1426 = scalar_lea.vmem %s4, %s1425
      // Predicated region
      $region37: #{tpu_custom_call.1} parent=35 // pred_check
        %p1427 = pneg %p138
      $region38: #{tpu_custom_call.1} parent=35 // pred_check_branch
        %1429 = sbr.rel (%p1427) target = $region40
      $region39: #{tpu_custom_call.1} parent=35 // pred_region
        %s1430 = smul.u32 3, %s20
      $region40: #{tpu_custom_call.1} parent=35 // pred_fallthru
        _
    $region36: #{tpu_custom_call.1} parent=5 // pred_fallthru
      _
    %p1431 = scmp.le.s32.totalorder 2, %s10
    // Predicated region
    $region41: #{tpu_custom_call.1} parent=5 // pred_check
      %p1432 = pneg %p1431
    $region42: #{tpu_custom_call.1} parent=5 // pred_check_branch
      %1434 = sbr.rel (%p1432) target = $region44
    $region43: #{tpu_custom_call.1} parent=5 // pred_region
      %s1435 = ssub.s32 %s10, 2
      // Predicated region
      $region45: #{tpu_custom_call.1} parent=43 // pred_check
        %p1436 = pneg %p144
      $region46: #{tpu_custom_call.1} parent=43 // pred_check_branch
        %1438 = sbr.rel (%p1436) target = $region48
      $region47: #{tpu_custom_call.1} parent=43 // pred_region
        %s1439 = smul.u32 3, %s22
        %p1440 = scmp.lt.s32.totalorder %s21, 1
        %s1441 = scalar_select %p1440, %s21, 1
        %p1442 = scmp.lt.s32.totalorder %s1439, 2
        %s1443 = scalar_select %p1442, %s1439, 2
        %s1444 = smul.addr %s1441, 6
        %s1445 = sadd.s32 %s1443, %s1444
        %s1446 = smul.addr %s1445, 8
        %s1447 = scalar_lea.vmem %s4, %s1446
      $region48: #{tpu_custom_call.1} parent=43 // pred_fallthru
        _
    $region44: #{tpu_custom_call.1} parent=5 // pred_fallthru
      _
  $region6: #{tpu_custom_call.1} parent=0 // loop_footer
    %s14 = sadd.s32 1, %s10
  $region7: #{tpu_custom_call.1} parent=0 // loop_footer_branch
    %9 = sbr.rel target = $region3
  $region8: #{tpu_custom_call.1} parent=0 // loop_exit
    _

</llo_original>
